<compile_context>
chip_gen: v7x
topology: tpu7x:2x2x1
jax: 0.10.0
libtpu: 0.0.40
codegen_flags: <defaults>
</compile_context>

<pallas_src>
import jax
import jax.numpy as jnp
import numpy as np
from jax import lax
from jax.experimental import pallas as pl
from jax.experimental.pallas import tpu as pltpu


# ---------------------------------------------------------------------------
# Fused forward kernel (one grid step = one batch tile of `bt` images).
# Row layout everywhere: r = b*24 + t   (b = image within the tile, t = slot).
# ---------------------------------------------------------------------------
def _lenet_kernel(x_ref, g0_ref, b0_ref, f0e_ref, f0o_ref,
                  g1_ref, b1_ref, f1e_ref, f1o_ref,
                  w0_ref, bd0_ref, w1_ref, bd1_ref, w2_ref, bd2_ref,
                  out_ref):
    f32 = jnp.float32

    def mm(a, w_ref):
        # bf16 x bf16 MXU matmul with f32 accumulation.
        return jnp.dot(a.astype(jnp.bfloat16), w_ref[...],
                       preferred_element_type=f32)

    def up(a, d):
        # Static row shift: result[r] = a[r + d].  Rows that wrap around only
        # ever land on unused "garbage" row slots.
        # TODO(synk): pltpu.roll would do this as a pure XLU rotate.
        return jnp.roll(a, -d, axis=0) if d else a

    # conv0 (1->6, 5x5) + bias + ReLU: one fused matmul, K = 5*28 = 140.
    # rows: (b, h0), h0 = 0..23;  lanes: (c, w0) = 6*24 = 144.
    y0 = jnp.maximum(mm(x_ref[...], g0_ref) + b0_ref[...], 0.0)

    # maxpool0: width pairs via constant selection matmuls, height pairs via a
    # row roll + max.  Valid pooled rows sit at t = 2*h', h' = 0..11.
    c0 = jnp.maximum(mm(y0, f0e_ref), mm(y0, f0o_ref))            # (R, 72)
    p0 = jnp.maximum(c0, up(c0, 1))

    # conv1 (6->16, 5x5) + bias + ReLU: one fused matmul, K = 5*72 = 360.
    # The 5 kh-shifted copies of p0 are stacked along lanes with static rolls.
    # Valid rows: t = 2*h1, h1 = 0..7;  lanes: (c, w1) = 16*8 = 128.
    q = jnp.concatenate([up(p0, 2 * kh) for kh in range(5)], axis=1)
    y1 = jnp.maximum(mm(q, g1_ref) + b1_ref[...], 0.0)

    # maxpool1: same scheme.  Valid rows: t = 4*k, k = 0..3;  lanes 16*4 = 64.
    c1 = jnp.maximum(mm(y1, f1e_ref), mm(y1, f1o_ref))            # (R, 64)
    p1 = jnp.maximum(c1, up(c1, 2))

    # Flatten (permutation folded into the fc0 weight): stack the 4 pooled
    # h-rows along lanes.  Valid row: t = 0;  lanes (h, c, w) = 4*16*4 = 256.
    ff = jnp.concatenate([up(p1, 4 * k) for k in range(4)], axis=1)

    # fc0 -> ReLU -> fc1 -> ReLU -> fc2 (output padded to 128 lanes; the pad
    # lanes carry a -1e9 bias so they vanish under log_softmax).
    z = jnp.maximum(mm(ff, w0_ref) + bd0_ref[...], 0.0)           # (R, 120)
    z = jnp.maximum(mm(z, w1_ref) + bd1_ref[...], 0.0)            # (R, 84)
    z = mm(z, w2_ref) + bd2_ref[...]                              # (R, 128)

    # log_softmax over classes; single lane-dense (unmasked) store.
    m = jnp.max(z, axis=-1, keepdims=True)
    s = z - m
    lse = jnp.log(jnp.sum(jnp.exp(s), axis=-1, keepdims=True))
    out_ref[...] = s - lse


# ---------------------------------------------------------------------------
# Wrapper: weight packing (weights-only, done once per call by XLA) + the
# single gridded pallas_call.
# ---------------------------------------------------------------------------
def _pack_conv_toeplitz(w, in_w, out_w):
    """(Cout, Cin, k, k) conv weight -> (k*Cin*in_w, Cout*out_w) banded matrix.

    M[kh*Cin*in_w + ci*in_w + wi, co*out_w + wo] = w[co, ci, kh, wi - wo]
    whenever 0 <= wi - wo < k (zero elsewhere).
    """
    cout, cin, k, _ = w.shape
    eyes = jnp.stack([jnp.eye(in_w, out_w, k=-kw, dtype=jnp.float32)
                      for kw in range(k)], axis=0)                 # (k, in_w, out_w)
    g = jnp.einsum("ochk,kiw->hciow", w.astype(jnp.float32), eyes)
    return g.reshape(k * cin * in_w, cout * out_w)


def _pool_select(channels, width, parity):
    """(C*W, C*W/2) 0/1 matrix: picks lane (c, 2*w+parity) into lane (c, w)."""
    half = width // 2
    m = np.zeros((channels * width, channels * half), np.float32)
    for c in range(channels):
        for w in range(half):
            m[c * width + 2 * w + parity, c * half + w] = 1.0
    return jnp.asarray(m)


def lenet_forward(params, x, *, batch_tile=None):
    """x: (B, 1, 28, 28) f32 NCHW -> (B, 10) log-probabilities."""
    B = x.shape[0]
    if batch_tile is None:
        batch_tile = B if B <= 8 else 8        # keep rows-per-step <= MXU height
    bt = batch_tile
    assert B % bt == 0, "batch must be divisible by the batch tile"
    rows = bt * 24

    xs = x.reshape(B, 28, 28).astype(jnp.float32)
    # Pre-shifted conv0 input, kh-stacked along the contraction axis (K = 140).
    xstack = jnp.concatenate([xs[:, kh:kh + 24, :] for kh in range(5)], axis=2)
    xstack = xstack.reshape(B * 24, 5 * 28).astype(jnp.bfloat16)

    bf = jnp.bfloat16
    g0 = _pack_conv_toeplitz(params["w_conv0"], 28, 24).astype(bf)   # (140, 144)
    g1 = _pack_conv_toeplitz(params["w_conv1"], 12, 8).astype(bf)    # (360, 128)
    b0 = jnp.repeat(params["b_conv0"], 24).reshape(1, 144).astype(jnp.float32)
    b1 = jnp.repeat(params["b_conv1"], 8).reshape(1, 128).astype(jnp.float32)

    f0e = _pool_select(6, 24, 0).astype(bf)      # (144, 72)
    f0o = _pool_select(6, 24, 1).astype(bf)
    f1e = _pool_select(16, 8, 0).astype(bf)      # (128, 64)
    f1o = _pool_select(16, 8, 1).astype(bf)

    # fc0 with the NCHW flatten permutation folded in: rows ordered (h, c, w).
    w0p = params["w_d0"].reshape(120, 16, 4, 4).transpose(2, 1, 3, 0)
    w0p = w0p.reshape(256, 120).astype(bf)
    bd0 = params["b_d0"].reshape(1, 120).astype(jnp.float32)
    w1t = params["w_d1"].T.astype(bf)                                # (120, 84)
    bd1 = params["b_d1"].reshape(1, 84).astype(jnp.float32)
    # fc2 padded to 128 lanes; pad bias -1e9 so padded logits vanish in softmax.
    w2t = jnp.zeros((84, 128), jnp.float32).at[:, :10].set(params["w_d2"].T)
    w2t = w2t.astype(bf)
    bd2 = jnp.full((1, 128), -1e9, jnp.float32).at[0, :10].set(params["b_d2"])

    weights = (g0, b0, f0e, f0o, g1, b1, f1e, f1o, w0p, bd0, w1t, bd1, w2t, bd2)

    def resident(shape):
        # Whole-array block with a constant index map -> stays VMEM-resident
        # across batch-grid steps.
        return pl.BlockSpec(shape, lambda i: (0, 0))

    out = pl.pallas_call(
        _lenet_kernel,
        out_shape=jax.ShapeDtypeStruct((B * 24, 128), jnp.float32),
        grid=(B // bt,),
        in_specs=[pl.BlockSpec((rows, 5 * 28), lambda i: (i, 0))]
                 + [resident(w.shape) for w in weights],
        out_specs=pl.BlockSpec((rows, 128), lambda i: (i, 0)),
        compiler_params=pltpu.CompilerParams(
            dimension_semantics=("parallel",)),
    )(xstack, *weights)

    # Row b*24 of each batch block holds that image's logits; lanes 0..9 are the
    # real classes (the rest are the -inf-ish padding).
    return out[::24, :10]


# ---------------------------------------------------------------------------
# Deterministic parameter init (mirrors the PyTorch module's init style)
# ---------------------------------------------------------------------------
def _xavier_uniform(key, shape, fan_in, fan_out):
    bound = jnp.sqrt(6.0 / (fan_in + fan_out))
    return jax.random.uniform(key, shape, jnp.float32, -bound, bound)


def _xavier_normal(key, shape, fan_in, fan_out):
    std = jnp.sqrt(2.0 / (fan_in + fan_out))
    return std * jax.random.normal(key, shape, jnp.float32)


def _bias_uniform(key, shape, fan_in):
    bound = 1.0 / jnp.sqrt(float(fan_in))
    return jax.random.uniform(key, shape, jnp.float32, -bound, bound)


def init_params(key):
    ks = jax.random.split(key, 10)
    p = {}
    p["w_conv0"] = _xavier_uniform(ks[0], (6, 1, 5, 5), 1 * 25, 6 * 25)
    p["b_conv0"] = _bias_uniform(ks[1], (6,), 1 * 25)
    p["w_conv1"] = _xavier_uniform(ks[2], (16, 6, 5, 5), 6 * 25, 16 * 25)
    p["b_conv1"] = _bias_uniform(ks[3], (16,), 6 * 25)
    p["w_d0"] = _xavier_normal(ks[4], (120, 256), 256, 120)
    p["b_d0"] = _bias_uniform(ks[5], (120,), 256)
    p["w_d1"] = _xavier_normal(ks[6], (84, 120), 120, 84)
    p["b_d1"] = _bias_uniform(ks[7], (84,), 120)
    p["w_d2"] = _xavier_normal(ks[8], (10, 84), 84, 10)
    p["b_d2"] = _bias_uniform(ks[9], (10,), 84)
    return p


# ---------------------------------------------------------------------------
# Pure-JAX reference (for the correctness self-check only)
# ---------------------------------------------------------------------------
def _reference_forward(params, x):
    hi = lax.Precision.HIGHEST
    dn = ("NCHW", "OIHW", "NCHW")
    y = lax.conv_general_dilated(x, params["w_conv0"], (1, 1), "VALID",
                                 dimension_numbers=dn, precision=hi)
    y = jnp.maximum(y + params["b_conv0"].reshape(1, -1, 1, 1), 0.0)
    y = lax.reduce_window(y, -jnp.inf, lax.max, (1, 1, 2, 2), (1, 1, 2, 2), "VALID")
    y = lax.conv_general_dilated(y, params["w_conv1"], (1, 1), "VALID",
                                 dimension_numbers=dn, precision=hi)
    y = jnp.maximum(y + params["b_conv1"].reshape(1, -1, 1, 1), 0.0)
    y = lax.reduce_window(y, -jnp.inf, lax.max, (1, 1, 2, 2), (1, 1, 2, 2), "VALID")
    y = y.reshape(y.shape[0], -1)
    y = jnp.maximum(jnp.dot(y, params["w_d0"].T, precision=hi) + params["b_d0"], 0.0)
    y = jnp.maximum(jnp.dot(y, params["w_d1"].T, precision=hi) + params["b_d1"], 0.0)
    y = jnp.dot(y, params["w_d2"].T, precision=hi) + params["b_d2"]
    return jax.nn.log_softmax(y, axis=-1)


if __name__ == "__main__":
    key = jax.random.PRNGKey(0)
    k_param, k_input = jax.random.split(key)
    params = init_params(k_param)
    # Linear(256, ...) after two conv+pool stages implies 28x28 inputs; batch=2.
    x = jax.random.normal(k_input, (2, 1, 28, 28), jnp.float32)

    out = jax.block_until_ready(jax.jit(lenet_forward)(params, x))

    assert out.shape == (2, 10), out.shape
    assert bool(jnp.all(jnp.isfinite(out)))
    # log_softmax rows must exponentiate-sum to 1.
    assert bool(jnp.allclose(jnp.sum(jnp.exp(out), axis=1), 1.0, atol=1e-4))
    # Structural correctness check against a pure-JAX f32 reference (kernel
    # matmuls are bf16, hence the loose tolerance).
    ref = jax.jit(_reference_forward)(params, x)
    assert bool(jnp.allclose(out, ref, atol=1.5e-1, rtol=2e-2)), \
        float(jnp.max(jnp.abs(out - ref)))
    print("KERNEL_OK")
</pallas_src>

<mosaic_0001>
module attributes {stable_mosaic.version = 11 : i64} {
  func.func @_lenet_kernel(%arg0: i32, %arg1: memref<48x140xbf16, #tpu.memory_space<vmem>>, %arg2: memref<140x144xbf16, #tpu.memory_space<vmem>>, %arg3: memref<1x144xf32, #tpu.memory_space<vmem>>, %arg4: memref<144x72xbf16, #tpu.memory_space<vmem>>, %arg5: memref<144x72xbf16, #tpu.memory_space<vmem>>, %arg6: memref<360x128xbf16, #tpu.memory_space<vmem>>, %arg7: memref<1x128xf32, #tpu.memory_space<vmem>>, %arg8: memref<128x64xbf16, #tpu.memory_space<vmem>>, %arg9: memref<128x64xbf16, #tpu.memory_space<vmem>>, %arg10: memref<256x120xbf16, #tpu.memory_space<vmem>>, %arg11: memref<1x120xf32, #tpu.memory_space<vmem>>, %arg12: memref<120x84xbf16, #tpu.memory_space<vmem>>, %arg13: memref<1x84xf32, #tpu.memory_space<vmem>>, %arg14: memref<84x128xbf16, #tpu.memory_space<vmem>>, %arg15: memref<1x128xf32, #tpu.memory_space<vmem>>, %arg16: memref<48x128xf32, #tpu.memory_space<vmem>>) attributes {dimension_semantics = [#tpu.dimension_semantics<parallel>], iteration_bounds = array<i64: 1>, scalar_prefetch = 0 : i64, scratch_operands = 0 : i64, tpu.core_type = #tpu.core_type<tc>, window_params = [{transform_indices = @transform_0, window_bounds = array<i64: 48, 140>}, {pipeline_mode = #tpu.pipeline_mode<synchronous>, transform_indices = @transform_1, window_bounds = array<i64: 140, 144>}, {pipeline_mode = #tpu.pipeline_mode<synchronous>, transform_indices = @transform_2, window_bounds = array<i64: 1, 144>}, {pipeline_mode = #tpu.pipeline_mode<synchronous>, transform_indices = @transform_3, window_bounds = array<i64: 144, 72>}, {pipeline_mode = #tpu.pipeline_mode<synchronous>, transform_indices = @transform_4, window_bounds = array<i64: 144, 72>}, {pipeline_mode = #tpu.pipeline_mode<synchronous>, transform_indices = @transform_5, window_bounds = array<i64: 360, 128>}, {pipeline_mode = #tpu.pipeline_mode<synchronous>, transform_indices = @transform_6, window_bounds = array<i64: 1, 128>}, {pipeline_mode = #tpu.pipeline_mode<synchronous>, transform_indices = @transform_7, window_bounds = array<i64: 128, 64>}, {pipeline_mode = #tpu.pipeline_mode<synchronous>, transform_indices = @transform_8, window_bounds = array<i64: 128, 64>}, {pipeline_mode = #tpu.pipeline_mode<synchronous>, transform_indices = @transform_9, window_bounds = array<i64: 256, 120>}, {pipeline_mode = #tpu.pipeline_mode<synchronous>, transform_indices = @transform_10, window_bounds = array<i64: 1, 120>}, {pipeline_mode = #tpu.pipeline_mode<synchronous>, transform_indices = @transform_11, window_bounds = array<i64: 120, 84>}, {pipeline_mode = #tpu.pipeline_mode<synchronous>, transform_indices = @transform_12, window_bounds = array<i64: 1, 84>}, {pipeline_mode = #tpu.pipeline_mode<synchronous>, transform_indices = @transform_13, window_bounds = array<i64: 84, 128>}, {pipeline_mode = #tpu.pipeline_mode<synchronous>, transform_indices = @transform_14, window_bounds = array<i64: 1, 128>}, {transform_indices = @transform_15, window_bounds = array<i64: 48, 128>}]} {
    %c0 = arith.constant 0 : index
    %c0_0 = arith.constant 0 : index
    %0 = vector.load %arg1[%c0, %c0_0] : memref<48x140xbf16, #tpu.memory_space<vmem>>, vector<48x140xbf16>
    %c0_1 = arith.constant 0 : index
    %c0_2 = arith.constant 0 : index
    %1 = vector.load %arg2[%c0_1, %c0_2] : memref<140x144xbf16, #tpu.memory_space<vmem>>, vector<140x144xbf16>
    %cst = arith.constant dense<0.000000e+00> : vector<48x144xf32>
    %2 = tpu.matmul %0, %1, %cst {dimension_numbers = #tpu.dot_dimension_numbers<[1], [0], [0], [1], [0, 0, 1, 1], [], []>} : vector<48x140xbf16>, vector<140x144xbf16>, vector<48x144xf32> -> vector<48x144xf32>
    %c0_3 = arith.constant 0 : index
    %c0_4 = arith.constant 0 : index
    %3 = vector.load %arg3[%c0_3, %c0_4] : memref<1x144xf32, #tpu.memory_space<vmem>>, vector<1x144xf32>
    %4 = vector.broadcast %3 : vector<1x144xf32> to vector<48x144xf32>
    %5 = arith.addf %2, %4 : vector<48x144xf32>
    %cst_5 = arith.constant 0.000000e+00 : f32
    %6 = vector.broadcast %cst_5 : f32 to vector<48x144xf32>
    %7 = arith.maximumf %5, %6 : vector<48x144xf32>
    %8 = arith.truncf %7 : vector<48x144xf32> to vector<48x144xbf16>
    %c0_6 = arith.constant 0 : index
    %c0_7 = arith.constant 0 : index
    %9 = vector.load %arg4[%c0_6, %c0_7] : memref<144x72xbf16, #tpu.memory_space<vmem>>, vector<144x72xbf16>
    %cst_8 = arith.constant dense<0.000000e+00> : vector<48x72xf32>
    %10 = tpu.matmul %8, %9, %cst_8 {dimension_numbers = #tpu.dot_dimension_numbers<[1], [0], [0], [1], [0, 0, 1, 1], [], []>} : vector<48x144xbf16>, vector<144x72xbf16>, vector<48x72xf32> -> vector<48x72xf32>
    %11 = arith.truncf %7 : vector<48x144xf32> to vector<48x144xbf16>
    %c0_9 = arith.constant 0 : index
    %c0_10 = arith.constant 0 : index
    %12 = vector.load %arg5[%c0_9, %c0_10] : memref<144x72xbf16, #tpu.memory_space<vmem>>, vector<144x72xbf16>
    %cst_11 = arith.constant dense<0.000000e+00> : vector<48x72xf32>
    %13 = tpu.matmul %11, %12, %cst_11 {dimension_numbers = #tpu.dot_dimension_numbers<[1], [0], [0], [1], [0, 0, 1, 1], [], []>} : vector<48x144xbf16>, vector<144x72xbf16>, vector<48x72xf32> -> vector<48x72xf32>
    %14 = arith.maximumf %10, %13 : vector<48x72xf32>
    %15 = vector.extract_strided_slice %14 {offsets = [1, 0], sizes = [47, 72], strides = [1, 1]} : vector<48x72xf32> to vector<47x72xf32>
    %16 = vector.extract_strided_slice %14 {offsets = [0, 0], sizes = [1, 72], strides = [1, 1]} : vector<48x72xf32> to vector<1x72xf32>
    %17 = tpu.concatenate %15, %16 in 0 : vector<47x72xf32>, vector<1x72xf32> -> vector<48x72xf32>
    %18 = arith.maximumf %14, %17 : vector<48x72xf32>
    %19 = vector.extract_strided_slice %18 {offsets = [2, 0], sizes = [46, 72], strides = [1, 1]} : vector<48x72xf32> to vector<46x72xf32>
    %20 = vector.extract_strided_slice %18 {offsets = [0, 0], sizes = [2, 72], strides = [1, 1]} : vector<48x72xf32> to vector<2x72xf32>
    %21 = tpu.concatenate %19, %20 in 0 : vector<46x72xf32>, vector<2x72xf32> -> vector<48x72xf32>
    %22 = vector.extract_strided_slice %18 {offsets = [4, 0], sizes = [44, 72], strides = [1, 1]} : vector<48x72xf32> to vector<44x72xf32>
    %23 = vector.extract_strided_slice %18 {offsets = [0, 0], sizes = [4, 72], strides = [1, 1]} : vector<48x72xf32> to vector<4x72xf32>
    %24 = tpu.concatenate %22, %23 in 0 : vector<44x72xf32>, vector<4x72xf32> -> vector<48x72xf32>
    %25 = vector.extract_strided_slice %18 {offsets = [6, 0], sizes = [42, 72], strides = [1, 1]} : vector<48x72xf32> to vector<42x72xf32>
    %26 = vector.extract_strided_slice %18 {offsets = [0, 0], sizes = [6, 72], strides = [1, 1]} : vector<48x72xf32> to vector<6x72xf32>
    %27 = tpu.concatenate %25, %26 in 0 : vector<42x72xf32>, vector<6x72xf32> -> vector<48x72xf32>
    %28 = vector.extract_strided_slice %18 {offsets = [8, 0], sizes = [40, 72], strides = [1, 1]} : vector<48x72xf32> to vector<40x72xf32>
    %29 = vector.extract_strided_slice %18 {offsets = [0, 0], sizes = [8, 72], strides = [1, 1]} : vector<48x72xf32> to vector<8x72xf32>
    %30 = tpu.concatenate %28, %29 in 0 : vector<40x72xf32>, vector<8x72xf32> -> vector<48x72xf32>
    %31 = tpu.concatenate %18, %21, %24, %27, %30 in 1 : vector<48x72xf32>, vector<48x72xf32>, vector<48x72xf32>, vector<48x72xf32>, vector<48x72xf32> -> vector<48x360xf32>
    %32 = arith.truncf %31 : vector<48x360xf32> to vector<48x360xbf16>
    %c0_12 = arith.constant 0 : index
    %c0_13 = arith.constant 0 : index
    %33 = vector.load %arg6[%c0_12, %c0_13] : memref<360x128xbf16, #tpu.memory_space<vmem>>, vector<360x128xbf16>
    %cst_14 = arith.constant dense<0.000000e+00> : vector<48x128xf32>
    %34 = tpu.matmul %32, %33, %cst_14 {dimension_numbers = #tpu.dot_dimension_numbers<[1], [0], [0], [1], [0, 0, 1, 1], [], []>} : vector<48x360xbf16>, vector<360x128xbf16>, vector<48x128xf32> -> vector<48x128xf32>
    %c0_15 = arith.constant 0 : index
    %c0_16 = arith.constant 0 : index
    %35 = vector.load %arg7[%c0_15, %c0_16] : memref<1x128xf32, #tpu.memory_space<vmem>>, vector<1x128xf32>
    %36 = vector.broadcast %35 : vector<1x128xf32> to vector<48x128xf32>
    %37 = arith.addf %34, %36 : vector<48x128xf32>
    %cst_17 = arith.constant 0.000000e+00 : f32
    %38 = vector.broadcast %cst_17 : f32 to vector<48x128xf32>
    %39 = arith.maximumf %37, %38 : vector<48x128xf32>
    %40 = arith.truncf %39 : vector<48x128xf32> to vector<48x128xbf16>
    %c0_18 = arith.constant 0 : index
    %c0_19 = arith.constant 0 : index
    %41 = vector.load %arg8[%c0_18, %c0_19] : memref<128x64xbf16, #tpu.memory_space<vmem>>, vector<128x64xbf16>
    %cst_20 = arith.constant dense<0.000000e+00> : vector<48x64xf32>
    %42 = tpu.matmul %40, %41, %cst_20 {dimension_numbers = #tpu.dot_dimension_numbers<[1], [0], [0], [1], [0, 0, 1, 1], [], []>} : vector<48x128xbf16>, vector<128x64xbf16>, vector<48x64xf32> -> vector<48x64xf32>
    %43 = arith.truncf %39 : vector<48x128xf32> to vector<48x128xbf16>
    %c0_21 = arith.constant 0 : index
    %c0_22 = arith.constant 0 : index
    %44 = vector.load %arg9[%c0_21, %c0_22] : memref<128x64xbf16, #tpu.memory_space<vmem>>, vector<128x64xbf16>
    %cst_23 = arith.constant dense<0.000000e+00> : vector<48x64xf32>
    %45 = tpu.matmul %43, %44, %cst_23 {dimension_numbers = #tpu.dot_dimension_numbers<[1], [0], [0], [1], [0, 0, 1, 1], [], []>} : vector<48x128xbf16>, vector<128x64xbf16>, vector<48x64xf32> -> vector<48x64xf32>
    %46 = arith.maximumf %42, %45 : vector<48x64xf32>
    %47 = vector.extract_strided_slice %46 {offsets = [2, 0], sizes = [46, 64], strides = [1, 1]} : vector<48x64xf32> to vector<46x64xf32>
    %48 = vector.extract_strided_slice %46 {offsets = [0, 0], sizes = [2, 64], strides = [1, 1]} : vector<48x64xf32> to vector<2x64xf32>
    %49 = tpu.concatenate %47, %48 in 0 : vector<46x64xf32>, vector<2x64xf32> -> vector<48x64xf32>
    %50 = arith.maximumf %46, %49 : vector<48x64xf32>
    %51 = vector.extract_strided_slice %50 {offsets = [4, 0], sizes = [44, 64], strides = [1, 1]} : vector<48x64xf32> to vector<44x64xf32>
    %52 = vector.extract_strided_slice %50 {offsets = [0, 0], sizes = [4, 64], strides = [1, 1]} : vector<48x64xf32> to vector<4x64xf32>
    %53 = tpu.concatenate %51, %52 in 0 : vector<44x64xf32>, vector<4x64xf32> -> vector<48x64xf32>
    %54 = vector.extract_strided_slice %50 {offsets = [8, 0], sizes = [40, 64], strides = [1, 1]} : vector<48x64xf32> to vector<40x64xf32>
    %55 = vector.extract_strided_slice %50 {offsets = [0, 0], sizes = [8, 64], strides = [1, 1]} : vector<48x64xf32> to vector<8x64xf32>
    %56 = tpu.concatenate %54, %55 in 0 : vector<40x64xf32>, vector<8x64xf32> -> vector<48x64xf32>
    %57 = vector.extract_strided_slice %50 {offsets = [12, 0], sizes = [36, 64], strides = [1, 1]} : vector<48x64xf32> to vector<36x64xf32>
    %58 = vector.extract_strided_slice %50 {offsets = [0, 0], sizes = [12, 64], strides = [1, 1]} : vector<48x64xf32> to vector<12x64xf32>
    %59 = tpu.concatenate %57, %58 in 0 : vector<36x64xf32>, vector<12x64xf32> -> vector<48x64xf32>
    %60 = tpu.concatenate %50, %53, %56, %59 in 1 : vector<48x64xf32>, vector<48x64xf32>, vector<48x64xf32>, vector<48x64xf32> -> vector<48x256xf32>
    %61 = arith.truncf %60 : vector<48x256xf32> to vector<48x256xbf16>
    %c0_24 = arith.constant 0 : index
    %c0_25 = arith.constant 0 : index
    %62 = vector.load %arg10[%c0_24, %c0_25] : memref<256x120xbf16, #tpu.memory_space<vmem>>, vector<256x120xbf16>
    %cst_26 = arith.constant dense<0.000000e+00> : vector<48x120xf32>
    %63 = tpu.matmul %61, %62, %cst_26 {dimension_numbers = #tpu.dot_dimension_numbers<[1], [0], [0], [1], [0, 0, 1, 1], [], []>} : vector<48x256xbf16>, vector<256x120xbf16>, vector<48x120xf32> -> vector<48x120xf32>
    %c0_27 = arith.constant 0 : index
    %c0_28 = arith.constant 0 : index
    %64 = vector.load %arg11[%c0_27, %c0_28] : memref<1x120xf32, #tpu.memory_space<vmem>>, vector<1x120xf32>
    %65 = vector.broadcast %64 : vector<1x120xf32> to vector<48x120xf32>
    %66 = arith.addf %63, %65 : vector<48x120xf32>
    %cst_29 = arith.constant 0.000000e+00 : f32
    %67 = vector.broadcast %cst_29 : f32 to vector<48x120xf32>
    %68 = arith.maximumf %66, %67 : vector<48x120xf32>
    %69 = arith.truncf %68 : vector<48x120xf32> to vector<48x120xbf16>
    %c0_30 = arith.constant 0 : index
    %c0_31 = arith.constant 0 : index
    %70 = vector.load %arg12[%c0_30, %c0_31] : memref<120x84xbf16, #tpu.memory_space<vmem>>, vector<120x84xbf16>
    %cst_32 = arith.constant dense<0.000000e+00> : vector<48x84xf32>
    %71 = tpu.matmul %69, %70, %cst_32 {dimension_numbers = #tpu.dot_dimension_numbers<[1], [0], [0], [1], [0, 0, 1, 1], [], []>} : vector<48x120xbf16>, vector<120x84xbf16>, vector<48x84xf32> -> vector<48x84xf32>
    %c0_33 = arith.constant 0 : index
    %c0_34 = arith.constant 0 : index
    %72 = vector.load %arg13[%c0_33, %c0_34] : memref<1x84xf32, #tpu.memory_space<vmem>>, vector<1x84xf32>
    %73 = vector.broadcast %72 : vector<1x84xf32> to vector<48x84xf32>
    %74 = arith.addf %71, %73 : vector<48x84xf32>
    %cst_35 = arith.constant 0.000000e+00 : f32
    %75 = vector.broadcast %cst_35 : f32 to vector<48x84xf32>
    %76 = arith.maximumf %74, %75 : vector<48x84xf32>
    %77 = arith.truncf %76 : vector<48x84xf32> to vector<48x84xbf16>
    %c0_36 = arith.constant 0 : index
    %c0_37 = arith.constant 0 : index
    %78 = vector.load %arg14[%c0_36, %c0_37] : memref<84x128xbf16, #tpu.memory_space<vmem>>, vector<84x128xbf16>
    %cst_38 = arith.constant dense<0.000000e+00> : vector<48x128xf32>
    %79 = tpu.matmul %77, %78, %cst_38 {dimension_numbers = #tpu.dot_dimension_numbers<[1], [0], [0], [1], [0, 0, 1, 1], [], []>} : vector<48x84xbf16>, vector<84x128xbf16>, vector<48x128xf32> -> vector<48x128xf32>
    %c0_39 = arith.constant 0 : index
    %c0_40 = arith.constant 0 : index
    %80 = vector.load %arg15[%c0_39, %c0_40] : memref<1x128xf32, #tpu.memory_space<vmem>>, vector<1x128xf32>
    %81 = vector.broadcast %80 : vector<1x128xf32> to vector<48x128xf32>
    %82 = arith.addf %79, %81 : vector<48x128xf32>
    %cst_41 = arith.constant dense<0xFF800000> : vector<48xf32>
    %83 = vector.multi_reduction <maximumf>, %82, %cst_41 [1] : vector<48x128xf32> to vector<48xf32>
    %84 = vector.shape_cast %83 : vector<48xf32> to vector<48x1xf32>
    %85 = vector.broadcast %84 : vector<48x1xf32> to vector<48x128xf32>
    %86 = arith.subf %82, %85 : vector<48x128xf32>
    %87 = math.exp %86 : vector<48x128xf32>
    %cst_42 = arith.constant dense<0.000000e+00> : vector<48xf32>
    %88 = vector.multi_reduction <add>, %87, %cst_42 [1] : vector<48x128xf32> to vector<48xf32>
    %89 = vector.shape_cast %88 : vector<48xf32> to vector<48x1xf32>
    %90 = math.log %89 : vector<48x1xf32>
    %91 = vector.broadcast %90 : vector<48x1xf32> to vector<48x128xf32>
    %92 = arith.subf %86, %91 : vector<48x128xf32>
    %c0_43 = arith.constant 0 : index
    %c0_44 = arith.constant 0 : index
    %93 = vector.load %arg16[%c0_43, %c0_44] : memref<48x128xf32, #tpu.memory_space<vmem>>, vector<48x128xf32>
    tpu.vector_store %arg16[%c0_43, %c0_44], %92 {strides = array<i32>} : memref<48x128xf32, #tpu.memory_space<vmem>>, vector<48x128xf32>,
    return
  }
  func.func @transform_0(%arg0: i32) -> (i32, i32) {
    %c0_i32 = arith.constant 0 : i32
    %c0_i32_0 = arith.constant 0 : i32
    return %arg0, %c0_i32 : i32, i32
  }
  func.func @transform_1(%arg0: i32) -> (i32, i32) {
    %c0_i32 = arith.constant 0 : i32
    %c0_i32_0 = arith.constant 0 : i32
    %c0_i32_1 = arith.constant 0 : i32
    return %c0_i32, %c0_i32_0 : i32, i32
  }
  func.func @transform_2(%arg0: i32) -> (i32, i32) {
    %c0_i32 = arith.constant 0 : i32
    %c0_i32_0 = arith.constant 0 : i32
    %c0_i32_1 = arith.constant 0 : i32
    return %c0_i32, %c0_i32_0 : i32, i32
  }
  func.func @transform_3(%arg0: i32) -> (i32, i32) {
    %c0_i32 = arith.constant 0 : i32
    %c0_i32_0 = arith.constant 0 : i32
    %c0_i32_1 = arith.constant 0 : i32
    return %c0_i32, %c0_i32_0 : i32, i32
  }
  func.func @transform_4(%arg0: i32) -> (i32, i32) {
    %c0_i32 = arith.constant 0 : i32
    %c0_i32_0 = arith.constant 0 : i32
    %c0_i32_1 = arith.constant 0 : i32
    return %c0_i32, %c0_i32_0 : i32, i32
  }
  func.func @transform_5(%arg0: i32) -> (i32, i32) {
    %c0_i32 = arith.constant 0 : i32
    %c0_i32_0 = arith.constant 0 : i32
    %c0_i32_1 = arith.constant 0 : i32
    return %c0_i32, %c0_i32_0 : i32, i32
  }
  func.func @transform_6(%arg0: i32) -> (i32, i32) {
    %c0_i32 = arith.constant 0 : i32
    %c0_i32_0 = arith.constant 0 : i32
    %c0_i32_1 = arith.constant 0 : i32
    return %c0_i32, %c0_i32_0 : i32, i32
  }
  func.func @transform_7(%arg0: i32) -> (i32, i32) {
    %c0_i32 = arith.constant 0 : i32
    %c0_i32_0 = arith.constant 0 : i32
    %c0_i32_1 = arith.constant 0 : i32
    return %c0_i32, %c0_i32_0 : i32, i32
  }
  func.func @transform_8(%arg0: i32) -> (i32, i32) {
    %c0_i32 = arith.constant 0 : i32
    %c0_i32_0 = arith.constant 0 : i32
    %c0_i32_1 = arith.constant 0 : i32
    return %c0_i32, %c0_i32_0 : i32, i32
  }
  func.func @transform_9(%arg0: i32) -> (i32, i32) {
    %c0_i32 = arith.constant 0 : i32
    %c0_i32_0 = arith.constant 0 : i32
    %c0_i32_1 = arith.constant 0 : i32
    return %c0_i32, %c0_i32_0 : i32, i32
  }
  func.func @transform_10(%arg0: i32) -> (i32, i32) {
    %c0_i32 = arith.constant 0 : i32
    %c0_i32_0 = arith.constant 0 : i32
    %c0_i32_1 = arith.constant 0 : i32
    return %c0_i32, %c0_i32_0 : i32, i32
  }
  func.func @transform_11(%arg0: i32) -> (i32, i32) {
    %c0_i32 = arith.constant 0 : i32
    %c0_i32_0 = arith.constant 0 : i32
    %c0_i32_1 = arith.constant 0 : i32
    return %c0_i32, %c0_i32_0 : i32, i32
  }
  func.func @transform_12(%arg0: i32) -> (i32, i32) {
    %c0_i32 = arith.constant 0 : i32
    %c0_i32_0 = arith.constant 0 : i32
    %c0_i32_1 = arith.constant 0 : i32
    return %c0_i32, %c0_i32_0 : i32, i32
  }
  func.func @transform_13(%arg0: i32) -> (i32, i32) {
    %c0_i32 = arith.constant 0 : i32
    %c0_i32_0 = arith.constant 0 : i32
    %c0_i32_1 = arith.constant 0 : i32
    return %c0_i32, %c0_i32_0 : i32, i32
  }
  func.func @transform_14(%arg0: i32) -> (i32, i32) {
    %c0_i32 = arith.constant 0 : i32
    %c0_i32_0 = arith.constant 0 : i32
    %c0_i32_1 = arith.constant 0 : i32
    return %c0_i32, %c0_i32_0 : i32, i32
  }
  func.func @transform_15(%arg0: i32) -> (i32, i32) {
    %c0_i32 = arith.constant 0 : i32
    %c0_i32_0 = arith.constant 0 : i32
    return %arg0, %c0_i32 : i32, i32
  }
}

</mosaic_0001>

<llo_original>
// kernel: lenet_forward.1
$region0: #{lenet_forward.1}
  #allocation0 [shape = 'u32[]', space=smem, size = 0x4, offset = 0x4, fixed_abs, tag = 'smem constant byte address 0x4 - core index']
  #allocation1 [shape = 'u32[144,128]{1,0:T(1,128)}', space=vmem, size = 0x12000, scoped, tag = 'internal scratch']
  %s0 = inlined_call_operand.vmem [shape: bf16[48,140], index: 0, kind: input, shape index: {}]
  %s1 = inlined_call_operand.vmem [shape: bf16[140,144], index: 1, kind: input, shape index: {}]
  %s2 = inlined_call_operand.vmem [shape: f32[1,144], index: 2, kind: input, shape index: {}]
  %s3 = inlined_call_operand.vmem [shape: bf16[144,72], index: 3, kind: input, shape index: {}]
  %s4 = inlined_call_operand.vmem [shape: bf16[144,72], index: 4, kind: input, shape index: {}]
  %s5 = inlined_call_operand.vmem [shape: bf16[360,128], index: 5, kind: input, shape index: {}]
  %s6 = inlined_call_operand.vmem [shape: f32[1,128], index: 6, kind: input, shape index: {}]
  %s7 = inlined_call_operand.vmem [shape: bf16[128,64], index: 7, kind: input, shape index: {}]
  %s8 = inlined_call_operand.vmem [shape: bf16[128,64], index: 8, kind: input, shape index: {}]
  %s9 = inlined_call_operand.vmem [shape: bf16[256,120], index: 9, kind: input, shape index: {}]
  %s10 = inlined_call_operand.vmem [shape: f32[1,120], index: 10, kind: input, shape index: {}]
  %s11 = inlined_call_operand.vmem [shape: bf16[120,84], index: 11, kind: input, shape index: {}]
  %s12 = inlined_call_operand.vmem [shape: f32[1,84], index: 12, kind: input, shape index: {}]
  %s13 = inlined_call_operand.vmem [shape: bf16[84,128], index: 13, kind: input, shape index: {}]
  %s14 = inlined_call_operand.vmem [shape: f32[1,128], index: 14, kind: input, shape index: {}]
  %s15 = inlined_call_operand.vmem [shape: f32[48,128], index: 15, kind: output, shape index: {}]
  %s16 = sld [smem:[#allocation0]]
  $region70: #{lenet_forward.1} parent=0
    _
  %s18 = ssub.s32 1, %s16
  %s19 = scalar_select 0, %s18, %s16
  // Predicated region
  $region2: #{lenet_forward.1} parent=0 // pred_check
    _
  $region3: #{lenet_forward.1} parent=0 // pred_check_branch
    %21 = sbr.rel (0) target = $region5
  $region4: #{lenet_forward.1} parent=0 // pred_region
    _
  $region5: #{lenet_forward.1} parent=0 // pred_fallthru
    _
  // Predicated region
  $region6: #{lenet_forward.1} parent=0 // pred_check
    _
  $region7: #{lenet_forward.1} parent=0 // pred_check_branch
    %23 = sbr.rel (0) target = $region9
  $region8: #{lenet_forward.1} parent=0 // pred_region
    _
  $region9: #{lenet_forward.1} parent=0 // pred_fallthru
    _
  // Predicated region
  $region10: #{lenet_forward.1} parent=0 // pred_check
    _
  $region11: #{lenet_forward.1} parent=0 // pred_check_branch
    %25 = sbr.rel (0) target = $region13
  $region12: #{lenet_forward.1} parent=0 // pred_region
    _
  $region13: #{lenet_forward.1} parent=0 // pred_fallthru
    _
  // Predicated region
  $region14: #{lenet_forward.1} parent=0 // pred_check
    _
  $region15: #{lenet_forward.1} parent=0 // pred_check_branch
    %27 = sbr.rel (0) target = $region17
  $region16: #{lenet_forward.1} parent=0 // pred_region
    _
  $region17: #{lenet_forward.1} parent=0 // pred_fallthru
    _
  // Predicated region
  $region18: #{lenet_forward.1} parent=0 // pred_check
    _
  $region19: #{lenet_forward.1} parent=0 // pred_check_branch
    %29 = sbr.rel (0) target = $region21
  $region20: #{lenet_forward.1} parent=0 // pred_region
    _
  $region21: #{lenet_forward.1} parent=0 // pred_fallthru
    _
  // Predicated region
  $region22: #{lenet_forward.1} parent=0 // pred_check
    _
  $region23: #{lenet_forward.1} parent=0 // pred_check_branch
    %31 = sbr.rel (0) target = $region25
  $region24: #{lenet_forward.1} parent=0 // pred_region
    _
  $region25: #{lenet_forward.1} parent=0 // pred_fallthru
    _
  // Predicated region
  $region26: #{lenet_forward.1} parent=0 // pred_check
    _
  $region27: #{lenet_forward.1} parent=0 // pred_check_branch
    %33 = sbr.rel (0) target = $region29
  $region28: #{lenet_forward.1} parent=0 // pred_region
    _
  $region29: #{lenet_forward.1} parent=0 // pred_fallthru
    _
  // Predicated region
  $region30: #{lenet_forward.1} parent=0 // pred_check
    _
  $region31: #{lenet_forward.1} parent=0 // pred_check_branch
    %35 = sbr.rel (0) target = $region33
  $region32: #{lenet_forward.1} parent=0 // pred_region
    _
  $region33: #{lenet_forward.1} parent=0 // pred_fallthru
    _
  // Predicated region
  $region34: #{lenet_forward.1} parent=0 // pred_check
    _
  $region35: #{lenet_forward.1} parent=0 // pred_check_branch
    %37 = sbr.rel (0) target = $region37
  $region36: #{lenet_forward.1} parent=0 // pred_region
    _
  $region37: #{lenet_forward.1} parent=0 // pred_fallthru
    _
  // Predicated region
  $region38: #{lenet_forward.1} parent=0 // pred_check
    _
  $region39: #{lenet_forward.1} parent=0 // pred_check_branch
    %39 = sbr.rel (0) target = $region41
  $region40: #{lenet_forward.1} parent=0 // pred_region
    _
  $region41: #{lenet_forward.1} parent=0 // pred_fallthru
    _
  // Predicated region
  $region42: #{lenet_forward.1} parent=0 // pred_check
    _
  $region43: #{lenet_forward.1} parent=0 // pred_check_branch
    %41 = sbr.rel (0) target = $region45
  $region44: #{lenet_forward.1} parent=0 // pred_region
    _
  $region45: #{lenet_forward.1} parent=0 // pred_fallthru
    _
  // Predicated region
  $region46: #{lenet_forward.1} parent=0 // pred_check
    _
  $region47: #{lenet_forward.1} parent=0 // pred_check_branch
    %43 = sbr.rel (0) target = $region49
  $region48: #{lenet_forward.1} parent=0 // pred_region
    _
  $region49: #{lenet_forward.1} parent=0 // pred_fallthru
    _
  // Predicated region
  $region50: #{lenet_forward.1} parent=0 // pred_check
    _
  $region51: #{lenet_forward.1} parent=0 // pred_check_branch
    %45 = sbr.rel (0) target = $region53
  $region52: #{lenet_forward.1} parent=0 // pred_region
    _
  $region53: #{lenet_forward.1} parent=0 // pred_fallthru
    _
  // Predicated region
  $region54: #{lenet_forward.1} parent=0 // pred_check
    _
  $region55: #{lenet_forward.1} parent=0 // pred_check_branch
    %47 = sbr.rel (0) target = $region57
  $region56: #{lenet_forward.1} parent=0 // pred_region
    _
  $region57: #{lenet_forward.1} parent=0 // pred_fallthru
    _
  // Predicated region
  $region58: #{lenet_forward.1} parent=0 // pred_check
    _
  $region59: #{lenet_forward.1} parent=0 // pred_check_branch
    %49 = sbr.rel (0) target = $region61
  $region60: #{lenet_forward.1} parent=0 // pred_region
    _
  $region61: #{lenet_forward.1} parent=0 // pred_fallthru
    _
  %v51 = vld [vmem:[%s0] sm:$0xff]
  %v52 = vld [vmem:[%s0 + $0x8] sm:$0xff]
  %v53 = vld [vmem:[%s0 + $0x10] sm:$0xff]
  %v54 = vld [vmem:[%s0 + $0x18] sm:$0xff]
  %v55 = vld [vmem:[%s0 + $0x20] sm:$0xff]
  %v56 = vld [vmem:[%s0 + $0x28] sm:$0xff]
  %v57 = vld [vmem:[%s1] sm:$0xff]
  %v58 = vld [vmem:[%s1 + $0x8] sm:$0xff]
  %v59 = vld [vmem:[%s1 + $0x10] sm:$0xff]
  %v60 = vld [vmem:[%s1 + $0x18] sm:$0xff]
  %v61 = vld [vmem:[%s1 + $0x20] sm:$0xff]
  %v62 = vld [vmem:[%s1 + $0x28] sm:$0xff]
  %v63 = vld [vmem:[%s1 + $0x30] sm:$0xff]
  %v64 = vld [vmem:[%s1 + $0x38] sm:$0xff]
  %v65 = vld [vmem:[%s1 + $0x40] sm:$0xff]
  %v66 = vld [vmem:[%s1 + $0x48] sm:$0xff]
  %v67 = vld [vmem:[%s1 + $0x50] sm:$0xff]
  %v68 = vld [vmem:[%s1 + $0x58] sm:$0xff]
  %v69 = vld [vmem:[%s1 + $0x60] sm:$0xff]
  %v70 = vld [vmem:[%s1 + $0x68] sm:$0xff]
  %v71 = vld [vmem:[%s1 + $0x70] sm:$0xff]
  %v72 = vld [vmem:[%s1 + $0x78] sm:$0xff]
  %v73 = vld [vmem:[%s1 + $0x80] sm:$0xff]
  %v74 = vld [vmem:[%s1 + $0x88] sm:$0x33]
  %v75 = vld [vmem:[%s2] sm:$0x3]
  %v77 = vlaneseq
  %v78 = vshrl.u32 %v77, 7
  %v79 = vsub.s32 0, %v78
  %v80 = vrot.slane %v75, %v79
  %v81 = vlaneseq
  %v82 = vshrl.u32 %v81, 7
  %v83 = vsub.s32 1, %v82
  %v84 = vrot.slane %v75, %v83
  %v93 = vunpack.c.l.b16 %v51
  %v94 = vunpack.c.h.b16 %v51
  %v95 = vunpack.c.l.b16 %v52
  %v96 = vunpack.c.h.b16 %v52
  %v97 = vunpack.c.l.b16 %v53
  %v98 = vunpack.c.h.b16 %v53
  %v99 = vunpack.c.l.b16 %v54
  %v100 = vunpack.c.h.b16 %v54
  %v101 = vunpack.c.l.b16 %v55
  %v102 = vunpack.c.h.b16 %v55
  %v103 = vunpack.c.l.b16 %v56
  %v104 = vunpack.c.h.b16 %v56
  %v105 = vpack.c.b16 %v95, %v93
  %v106 = vpack.c.b16 %v96, %v94
  %v107 = vpack.c.b16 %v99, %v97
  %v108 = vpack.c.b16 %v100, %v98
  %v109 = vpack.c.b16 %v103, %v101
  %v110 = vpack.c.b16 %v104, %v102
  %v132 = vunpack.c.l.b16 %v57
  %v133 = vunpack.c.h.b16 %v57
  %v134 = vunpack.c.l.b16 %v58
  %v135 = vunpack.c.h.b16 %v58
  %v136 = vunpack.c.l.b16 %v59
  %v137 = vunpack.c.h.b16 %v59
  %v138 = vunpack.c.l.b16 %v60
  %v139 = vunpack.c.h.b16 %v60
  %v140 = vunpack.c.l.b16 %v61
  %v141 = vunpack.c.h.b16 %v61
  %v142 = vunpack.c.l.b16 %v62
  %v143 = vunpack.c.h.b16 %v62
  %v144 = vunpack.c.l.b16 %v63
  %v145 = vunpack.c.h.b16 %v63
  %v146 = vunpack.c.l.b16 %v64
  %v147 = vunpack.c.h.b16 %v64
  %v148 = vunpack.c.l.b16 %v65
  %v149 = vunpack.c.h.b16 %v65
  %v150 = vunpack.c.l.b16 %v66
  %v151 = vunpack.c.h.b16 %v66
  %v152 = vunpack.c.l.b16 %v67
  %v153 = vunpack.c.h.b16 %v67
  %v154 = vunpack.c.l.b16 %v68
  %v155 = vunpack.c.h.b16 %v68
  %v156 = vunpack.c.l.b16 %v69
  %v157 = vunpack.c.h.b16 %v69
  %v158 = vunpack.c.l.b16 %v70
  %v159 = vunpack.c.h.b16 %v70
  %v160 = vunpack.c.l.b16 %v71
  %v161 = vunpack.c.h.b16 %v71
  %v162 = vunpack.c.l.b16 %v72
  %v163 = vunpack.c.h.b16 %v72
  %v164 = vunpack.c.l.b16 %v73
  %v165 = vunpack.c.h.b16 %v73
  %v166 = vunpack.c.l.b16 %v74
  %v167 = vunpack.c.h.b16 %v74
  %v168 = vpack.c.b16 %v134, %v132
  %v169 = vpack.c.b16 %v135, %v133
  %v170 = vpack.c.b16 %v138, %v136
  %v171 = vpack.c.b16 %v139, %v137
  %v172 = vpack.c.b16 %v142, %v140
  %v173 = vpack.c.b16 %v143, %v141
  %v174 = vpack.c.b16 %v146, %v144
  %v175 = vpack.c.b16 %v147, %v145
  %v176 = vpack.c.b16 %v150, %v148
  %v177 = vpack.c.b16 %v151, %v149
  %v178 = vpack.c.b16 %v154, %v152
  %v179 = vpack.c.b16 %v155, %v153
  %v180 = vpack.c.b16 %v158, %v156
  %v181 = vpack.c.b16 %v159, %v157
  %v182 = vpack.c.b16 %v162, %v160
  %v183 = vpack.c.b16 %v163, %v161
  %v184 = vpack.c.b16 %v166, %v164
  %v185 = vpack.c.b16 %v167, %v165
  %vm202 = vcmask 97280
  %v204 = vsel %vm202, %v106, 0
  %v207 = vsel %vm202, %v108, 0
  %v210 = vsel %vm202, %v110, 0
  %vm212 = vcmask 1045504
  %v214 = vsel %vm212, %v184, 0
  %v217 = vsel %vm212, %v185, 0
  %219 = vmatprep.subr.bf16.mxu0 %v169
  %220 = vmatpush1.bf16.msra.mxu0 %v168
  %221 = vmatprep.subr.bf16.mxu0 %v171
  %222 = vmatpush1.bf16.msra.mxu0 %v170
  %223 = vmatprep.subr.bf16.mxu0 %v173
  %224 = vmatpush1.bf16.msra.mxu0 %v172
  %225 = vmatprep.subr.bf16.mxu0 %v175
  %226 = vmatpush1.bf16.msra.mxu0 %v174
  %227 = vmatprep.subr.bf16.mxu0 %v177
  %228 = vmatpush1.bf16.msra.mxu0 %v176
  %229 = vmatprep.subr.bf16.mxu0 %v179
  %230 = vmatpush1.bf16.msra.mxu0 %v178
  %231 = vmatprep.subr.bf16.mxu0 %v181
  %232 = vmatpush1.bf16.msra.mxu0 %v180
  %233 = vmatprep.subr.bf16.mxu0 %v183
  %234 = vmatpush1.bf16.msra.mxu0 %v182
  %235 = vmatprep.subr.bf16.mxu0 %v217
  %236 = vmatpush1.bf16.msra.mxu0 %v214
  %237 = vmatprep.subr.bf16.mxu0 0
  %238 = vmatpush1.bf16.msra.mxu0 0
  %239 = vmatprep.subr.bf16.mxu0 0
  %240 = vmatpush1.bf16.msra.mxu0 0
  %241 = vmatprep.subr.bf16.mxu0 0
  %242 = vmatpush1.bf16.msra.mxu0 0
  %243 = vmatprep.subr.bf16.mxu0 0
  %244 = vmatpush1.bf16.msra.mxu0 0
  %245 = vmatprep.subr.bf16.mxu0 0
  %246 = vmatpush1.bf16.msra.mxu0 0
  %247 = vmatprep.subr.bf16.mxu0 0
  %248 = vmatpush1.bf16.msra.mxu0 0
  %249 = vmatprep.subr.bf16.mxu0 0
  %250 = vmatpush1.bf16.msra.mxu0 0
  %251 = vmatprep.mubr.bf16.mxu0 %v204
  %252 = vmatmul.mubr.bf16.gmra.mrb[0].mxu0 %v105
  %v253 = vpop.f32.mrb[0].mxu0
  %v254 = vadd.f32 %v80, %v253
  %v255 = vpop.f32.mrb[0].mxu0
  %v256 = vadd.f32 %v84, %v255
  %v257 = vpop.f32.mrb[0].mxu0
  %v258 = vadd.f32 %v80, %v257
  %v259 = vpop.f32.mrb[0].mxu0
  %v260 = vadd.f32 %v84, %v259
  %261 = vmatprep.mubr.bf16.mxu0 %v207
  %262 = vmatmul.mubr.bf16.gmra.mrb[0].mxu0 %v107
  %v263 = vpop.f32.mrb[0].mxu0
  %v264 = vadd.f32 %v80, %v263
  %v265 = vpop.f32.mrb[0].mxu0
  %v266 = vadd.f32 %v84, %v265
  %v267 = vpop.f32.mrb[0].mxu0
  %v268 = vadd.f32 %v80, %v267
  %v269 = vpop.f32.mrb[0].mxu0
  %v270 = vadd.f32 %v84, %v269
  %271 = vmatprep.mubr.bf16.mxu0 %v210
  %272 = vmatmul.mubr.bf16.gmra.mrb[0].mxu0 %v109
  %v273 = vpop.f32.mrb[0].mxu0
  %v274 = vadd.f32 %v80, %v273
  %v275 = vpop.f32.mrb[0].mxu0
  %v276 = vadd.f32 %v84, %v275
  %v277 = vpop.f32.mrb[0].mxu0
  %v278 = vadd.f32 %v80, %v277
  %v279 = vpop.f32.mrb[0].mxu0
  %v280 = vadd.f32 %v84, %v279
  %281 = vdwg.mxu0
  %v282 = vmax.f32 %v254, 0.0
  %v283 = vmax.f32 %v256, 0.0
  %v284 = vmax.f32 %v258, 0.0
  %v285 = vmax.f32 %v260, 0.0
  %v286 = vmax.f32 %v264, 0.0
  %v287 = vmax.f32 %v266, 0.0
  %v288 = vmax.f32 %v268, 0.0
  %v289 = vmax.f32 %v270, 0.0
  %v290 = vmax.f32 %v274, 0.0
  %v291 = vmax.f32 %v276, 0.0
  %v292 = vmax.f32 %v278, 0.0
  %v293 = vmax.f32 %v280, 0.0
  %v294 = vpack.c.bf16 %v284, %v282
  %v295 = vpack.c.bf16 %v285, %v283
  %v296 = vpack.c.bf16 %v288, %v286
  %v297 = vpack.c.bf16 %v289, %v287
  %v298 = vpack.c.bf16 %v292, %v290
  %v299 = vpack.c.bf16 %v293, %v291
  %v300 = vld [vmem:[%s3] sm:$0xf]
  %v301 = vld [vmem:[%s3 + $0x4] sm:$0xf]
  %v302 = vld [vmem:[%s3 + $0x8] sm:$0xf]
  %v303 = vld [vmem:[%s3 + $0xc] sm:$0xf]
  %v304 = vld [vmem:[%s3 + $0x10] sm:$0xf]
  %v305 = vld [vmem:[%s3 + $0x14] sm:$0xf]
  %v306 = vld [vmem:[%s3 + $0x18] sm:$0xf]
  %v307 = vld [vmem:[%s3 + $0x1c] sm:$0xf]
  %v308 = vld [vmem:[%s3 + $0x20] sm:$0xf]
  %v309 = vld [vmem:[%s3 + $0x24] sm:$0xf]
  %v310 = vld [vmem:[%s3 + $0x28] sm:$0xf]
  %v311 = vld [vmem:[%s3 + $0x2c] sm:$0xf]
  %v312 = vld [vmem:[%s3 + $0x30] sm:$0xf]
  %v313 = vld [vmem:[%s3 + $0x34] sm:$0xf]
  %v314 = vld [vmem:[%s3 + $0x38] sm:$0xf]
  %v315 = vld [vmem:[%s3 + $0x3c] sm:$0xf]
  %v316 = vld [vmem:[%s3 + $0x40] sm:$0xf]
  %v317 = vld [vmem:[%s3 + $0x44] sm:$0xf]
  %v336 = vunpack.c.l.b16 %v300
  %v337 = vunpack.c.l.b16 %v301
  %v338 = vunpack.c.l.b16 %v302
  %v339 = vunpack.c.l.b16 %v303
  %v340 = vunpack.c.l.b16 %v304
  %v341 = vunpack.c.l.b16 %v305
  %v342 = vunpack.c.l.b16 %v306
  %v343 = vunpack.c.l.b16 %v307
  %v344 = vunpack.c.l.b16 %v308
  %v345 = vunpack.c.l.b16 %v309
  %v346 = vunpack.c.l.b16 %v310
  %v347 = vunpack.c.l.b16 %v311
  %v348 = vunpack.c.l.b16 %v312
  %v349 = vunpack.c.l.b16 %v313
  %v350 = vunpack.c.l.b16 %v314
  %v351 = vunpack.c.l.b16 %v315
  %v352 = vunpack.c.l.b16 %v316
  %v353 = vunpack.c.l.b16 %v317
  %v354 = vpack.c.b16 %v337, %v336
  %v355 = vpack.c.b16 %v339, %v338
  %v356 = vpack.c.b16 %v341, %v340
  %v357 = vpack.c.b16 %v343, %v342
  %v358 = vpack.c.b16 %v345, %v344
  %v359 = vpack.c.b16 %v347, %v346
  %v360 = vpack.c.b16 %v349, %v348
  %v361 = vpack.c.b16 %v351, %v350
  %v362 = vpack.c.b16 %v353, %v352
  %vm372 = vcmask 130048
  %v374 = vsel %vm372, %v295, 0
  %v377 = vsel %vm372, %v297, 0
  %v380 = vsel %vm372, %v299, 0
  %382 = vmatprep.subr.bf16.mxu0 0
  %383 = vmatpush1.bf16.msra.mxu0 %v354
  %384 = vmatprep.subr.bf16.mxu0 0
  %385 = vmatpush1.bf16.msra.mxu0 %v355
  %386 = vmatprep.subr.bf16.mxu0 0
  %387 = vmatpush1.bf16.msra.mxu0 %v356
  %388 = vmatprep.subr.bf16.mxu0 0
  %389 = vmatpush1.bf16.msra.mxu0 %v357
  %390 = vmatprep.subr.bf16.mxu0 0
  %391 = vmatpush1.bf16.msra.mxu0 %v358
  %392 = vmatprep.subr.bf16.mxu0 0
  %393 = vmatpush1.bf16.msra.mxu0 %v359
  %394 = vmatprep.subr.bf16.mxu0 0
  %395 = vmatpush1.bf16.msra.mxu0 %v360
  %396 = vmatprep.subr.bf16.mxu0 0
  %397 = vmatpush1.bf16.msra.mxu0 %v361
  %398 = vmatprep.subr.bf16.mxu0 0
  %399 = vmatpush1.bf16.msra.mxu0 %v362
  %400 = vmatprep.subr.bf16.mxu0 0
  %401 = vmatpush1.bf16.msra.mxu0 0
  %402 = vmatprep.subr.bf16.mxu0 0
  %403 = vmatpush1.bf16.msra.mxu0 0
  %404 = vmatprep.subr.bf16.mxu0 0
  %405 = vmatpush1.bf16.msra.mxu0 0
  %406 = vmatprep.subr.bf16.mxu0 0
  %407 = vmatpush1.bf16.msra.mxu0 0
  %408 = vmatprep.subr.bf16.mxu0 0
  %409 = vmatpush1.bf16.msra.mxu0 0
  %410 = vmatprep.subr.bf16.mxu0 0
  %411 = vmatpush1.bf16.msra.mxu0 0
  %412 = vmatprep.subr.bf16.mxu0 0
  %413 = vmatpush1.bf16.msra.mxu0 0
  %414 = vmatprep.mubr.bf16.mxu0 %v374
  %415 = vmatmul.mubr.bf16.gmra.mrb[0].mxu0 %v294
  %v416 = vpop.f32.mrb[0].mxu0
  %v417 = vadd.f32 0.0, %v416
  %v418 = vpop.f32.mrb[0].mxu0
  %v419 = vpop.f32.mrb[0].mxu0
  %v420 = vadd.f32 0.0, %v419
  %v421 = vpop.f32.mrb[0].mxu0
  %422 = vmatprep.mubr.bf16.mxu0 %v377
  %423 = vmatmul.mubr.bf16.gmra.mrb[0].mxu0 %v296
  %v424 = vpop.f32.mrb[0].mxu0
  %v425 = vadd.f32 0.0, %v424
  %v426 = vpop.f32.mrb[0].mxu0
  %v427 = vpop.f32.mrb[0].mxu0
  %v428 = vadd.f32 0.0, %v427
  %v429 = vpop.f32.mrb[0].mxu0
  %430 = vmatprep.mubr.bf16.mxu0 %v380
  %431 = vmatmul.mubr.bf16.gmra.mrb[0].mxu0 %v298
  %v432 = vpop.f32.mrb[0].mxu0
  %v433 = vadd.f32 0.0, %v432
  %v434 = vpop.f32.mrb[0].mxu0
  %v435 = vpop.f32.mrb[0].mxu0
  %v436 = vadd.f32 0.0, %v435
  %v437 = vpop.f32.mrb[0].mxu0
  %438 = vdwg.mxu0
  %v439 = vld [vmem:[%s4] sm:$0xf]
  %v440 = vld [vmem:[%s4 + $0x4] sm:$0xf]
  %v441 = vld [vmem:[%s4 + $0x8] sm:$0xf]
  %v442 = vld [vmem:[%s4 + $0xc] sm:$0xf]
  %v443 = vld [vmem:[%s4 + $0x10] sm:$0xf]
  %v444 = vld [vmem:[%s4 + $0x14] sm:$0xf]
  %v445 = vld [vmem:[%s4 + $0x18] sm:$0xf]
  %v446 = vld [vmem:[%s4 + $0x1c] sm:$0xf]
  %v447 = vld [vmem:[%s4 + $0x20] sm:$0xf]
  %v448 = vld [vmem:[%s4 + $0x24] sm:$0xf]
  %v449 = vld [vmem:[%s4 + $0x28] sm:$0xf]
  %v450 = vld [vmem:[%s4 + $0x2c] sm:$0xf]
  %v451 = vld [vmem:[%s4 + $0x30] sm:$0xf]
  %v452 = vld [vmem:[%s4 + $0x34] sm:$0xf]
  %v453 = vld [vmem:[%s4 + $0x38] sm:$0xf]
  %v454 = vld [vmem:[%s4 + $0x3c] sm:$0xf]
  %v455 = vld [vmem:[%s4 + $0x40] sm:$0xf]
  %v456 = vld [vmem:[%s4 + $0x44] sm:$0xf]
  %v475 = vunpack.c.l.b16 %v439
  %v476 = vunpack.c.l.b16 %v440
  %v477 = vunpack.c.l.b16 %v441
  %v478 = vunpack.c.l.b16 %v442
  %v479 = vunpack.c.l.b16 %v443
  %v480 = vunpack.c.l.b16 %v444
  %v481 = vunpack.c.l.b16 %v445
  %v482 = vunpack.c.l.b16 %v446
  %v483 = vunpack.c.l.b16 %v447
  %v484 = vunpack.c.l.b16 %v448
  %v485 = vunpack.c.l.b16 %v449
  %v486 = vunpack.c.l.b16 %v450
  %v487 = vunpack.c.l.b16 %v451
  %v488 = vunpack.c.l.b16 %v452
  %v489 = vunpack.c.l.b16 %v453
  %v490 = vunpack.c.l.b16 %v454
  %v491 = vunpack.c.l.b16 %v455
  %v492 = vunpack.c.l.b16 %v456
  %v493 = vpack.c.b16 %v476, %v475
  %v494 = vpack.c.b16 %v478, %v477
  %v495 = vpack.c.b16 %v480, %v479
  %v496 = vpack.c.b16 %v482, %v481
  %v497 = vpack.c.b16 %v484, %v483
  %v498 = vpack.c.b16 %v486, %v485
  %v499 = vpack.c.b16 %v488, %v487
  %v500 = vpack.c.b16 %v490, %v489
  %v501 = vpack.c.b16 %v492, %v491
  %511 = vmatprep.subr.bf16.mxu0 0
  %512 = vmatpush1.bf16.msra.mxu0 %v493
  %513 = vmatprep.subr.bf16.mxu0 0
  %514 = vmatpush1.bf16.msra.mxu0 %v494
  %515 = vmatprep.subr.bf16.mxu0 0
  %516 = vmatpush1.bf16.msra.mxu0 %v495
  %517 = vmatprep.subr.bf16.mxu0 0
  %518 = vmatpush1.bf16.msra.mxu0 %v496
  %519 = vmatprep.subr.bf16.mxu0 0
  %520 = vmatpush1.bf16.msra.mxu0 %v497
  %521 = vmatprep.subr.bf16.mxu0 0
  %522 = vmatpush1.bf16.msra.mxu0 %v498
  %523 = vmatprep.subr.bf16.mxu0 0
  %524 = vmatpush1.bf16.msra.mxu0 %v499
  %525 = vmatprep.subr.bf16.mxu0 0
  %526 = vmatpush1.bf16.msra.mxu0 %v500
  %527 = vmatprep.subr.bf16.mxu0 0
  %528 = vmatpush1.bf16.msra.mxu0 %v501
  %529 = vmatprep.subr.bf16.mxu0 0
  %530 = vmatpush1.bf16.msra.mxu0 0
  %531 = vmatprep.subr.bf16.mxu0 0
  %532 = vmatpush1.bf16.msra.mxu0 0
  %533 = vmatprep.subr.bf16.mxu0 0
  %534 = vmatpush1.bf16.msra.mxu0 0
  %535 = vmatprep.subr.bf16.mxu0 0
  %536 = vmatpush1.bf16.msra.mxu0 0
  %537 = vmatprep.subr.bf16.mxu0 0
  %538 = vmatpush1.bf16.msra.mxu0 0
  %539 = vmatprep.subr.bf16.mxu0 0
  %540 = vmatpush1.bf16.msra.mxu0 0
  %541 = vmatprep.subr.bf16.mxu0 0
  %542 = vmatpush1.bf16.msra.mxu0 0
  %543 = vmatprep.mubr.bf16.mxu0 %v374
  %544 = vmatmul.mubr.bf16.gmra.mrb[0].mxu0 %v294
  %v545 = vpop.f32.mrb[0].mxu0
  %v546 = vadd.f32 0.0, %v545
  %v547 = vpop.f32.mrb[0].mxu0
  %v548 = vpop.f32.mrb[0].mxu0
  %v549 = vadd.f32 0.0, %v548
  %v550 = vpop.f32.mrb[0].mxu0
  %551 = vmatprep.mubr.bf16.mxu0 %v377
  %552 = vmatmul.mubr.bf16.gmra.mrb[0].mxu0 %v296
  %v553 = vpop.f32.mrb[0].mxu0
  %v554 = vadd.f32 0.0, %v553
  %v555 = vpop.f32.mrb[0].mxu0
  %v556 = vpop.f32.mrb[0].mxu0
  %v557 = vadd.f32 0.0, %v556
  %v558 = vpop.f32.mrb[0].mxu0
  %559 = vmatprep.mubr.bf16.mxu0 %v380
  %560 = vmatmul.mubr.bf16.gmra.mrb[0].mxu0 %v298
  %v561 = vpop.f32.mrb[0].mxu0
  %v562 = vadd.f32 0.0, %v561
  %v563 = vpop.f32.mrb[0].mxu0
  %v564 = vpop.f32.mrb[0].mxu0
  %v565 = vadd.f32 0.0, %v564
  %v566 = vpop.f32.mrb[0].mxu0
  %567 = vdwg.mxu0
  %v568 = vmax.f32 %v417, %v546
  %v569 = vmax.f32 %v420, %v549
  %v570 = vmax.f32 %v425, %v554
  %v571 = vmax.f32 %v428, %v557
  %v572 = vmax.f32 %v433, %v562
  %v573 = vmax.f32 %v436, %v565
  %vm580 = vcmask 1046528
  %v581 = vrot.slane %v568, 1
  %v582 = vrot.slane %v569, 1
  %v583 = vsel %vm580, %v581, %v582
  %v584 = vrot.slane %v570, 1
  %v585 = vsel %vm580, %v582, %v584
  %v586 = vrot.slane %v571, 1
  %v587 = vsel %vm580, %v584, %v586
  %v588 = vrot.slane %v572, 1
  %v589 = vsel %vm580, %v586, %v588
  %v590 = vrot.slane %v573, 1
  %v591 = vsel %vm580, %v588, %v590
  %v599 = vsel %vm580, %v590, %v581
  %v600 = vmax.f32 %v568, %v583
  %v601 = vmax.f32 %v569, %v585
  %v602 = vmax.f32 %v570, %v587
  %v603 = vmax.f32 %v571, %v589
  %v604 = vmax.f32 %v572, %v591
  %v605 = vmax.f32 %v573, %v599
  %v612 = vrot.slane %v600, 2
  %v613 = vrot.slane %v601, 2
  %v614 = vsel %vm212, %v612, %v613
  %v615 = vrot.slane %v602, 2
  %v616 = vsel %vm212, %v613, %v615
  %v617 = vrot.slane %v603, 2
  %v618 = vsel %vm212, %v615, %v617
  %v619 = vrot.slane %v604, 2
  %v620 = vsel %vm212, %v617, %v619
  %v621 = vrot.slane %v605, 2
  %v622 = vsel %vm212, %v619, %v621
  %v625 = vsel %vm212, %v621, %v612
  %vm626 = vcmask 1043456
  %v627 = vrot.slane %v600, 4
  %v628 = vrot.slane %v601, 4
  %v629 = vsel %vm626, %v627, %v628
  %v630 = vrot.slane %v602, 4
  %v631 = vsel %vm626, %v628, %v630
  %v632 = vrot.slane %v603, 4
  %v633 = vsel %vm626, %v630, %v632
  %v634 = vrot.slane %v604, 4
  %v635 = vsel %vm626, %v632, %v634
  %v636 = vrot.slane %v605, 4
  %v637 = vsel %vm626, %v634, %v636
  %v640 = vsel %vm626, %v636, %v627
  %vm641 = vcmask 1041408
  %v642 = vrot.slane %v600, 6
  %v643 = vrot.slane %v601, 6
  %v644 = vsel %vm641, %v642, %v643
  %v645 = vrot.slane %v602, 6
  %v646 = vsel %vm641, %v643, %v645
  %v647 = vrot.slane %v603, 6
  %v648 = vsel %vm641, %v645, %v647
  %v649 = vrot.slane %v604, 6
  %v650 = vsel %vm641, %v647, %v649
  %v651 = vrot.slane %v605, 6
  %v652 = vsel %vm641, %v649, %v651
  %v655 = vsel %vm641, %v651, %v642
  %657 = vrot.lane.b32.xlu0 %v614, 72
  %v658 = vpop.permute.xlu0 %657
  %659 = vrot.lane.b32.xlu0 %v616, 72
  %v660 = vpop.permute.xlu0 %659
  %661 = vrot.lane.b32.xlu0 %v618, 72
  %v662 = vpop.permute.xlu0 %661
  %663 = vrot.lane.b32.xlu0 %v620, 72
  %v664 = vpop.permute.xlu0 %663
  %665 = vrot.lane.b32.xlu0 %v622, 72
  %v666 = vpop.permute.xlu0 %665
  %667 = vrot.lane.b32.xlu0 %v625, 72
  %v668 = vpop.permute.xlu0 %667
  %676 = vrot.lane.b32.xlu0 %v629, 16
  %v677 = vpop.permute.xlu0 %676
  %678 = vrot.lane.b32.xlu0 %v631, 16
  %v679 = vpop.permute.xlu0 %678
  %680 = vrot.lane.b32.xlu0 %v633, 16
  %v681 = vpop.permute.xlu0 %680
  %682 = vrot.lane.b32.xlu0 %v635, 16
  %v683 = vpop.permute.xlu0 %682
  %684 = vrot.lane.b32.xlu0 %v637, 16
  %v685 = vpop.permute.xlu0 %684
  %686 = vrot.lane.b32.xlu0 %v640, 16
  %v687 = vpop.permute.xlu0 %686
  %695 = vrot.lane.b32.xlu0 %v644, 88
  %v696 = vpop.permute.xlu0 %695
  %697 = vrot.lane.b32.xlu0 %v646, 88
  %v698 = vpop.permute.xlu0 %697
  %699 = vrot.lane.b32.xlu0 %v648, 88
  %v700 = vpop.permute.xlu0 %699
  %701 = vrot.lane.b32.xlu0 %v650, 88
  %v702 = vpop.permute.xlu0 %701
  %703 = vrot.lane.b32.xlu0 %v652, 88
  %v704 = vpop.permute.xlu0 %703
  %705 = vrot.lane.b32.xlu0 %v655, 88
  %v706 = vpop.permute.xlu0 %705
  %713 = vrot.lane.b32.xlu0 %v601, 32
  %v714 = vpop.permute.xlu0 %713
  %715 = vrot.lane.b32.xlu0 %v602, 32
  %v716 = vpop.permute.xlu0 %715
  %717 = vrot.lane.b32.xlu0 %v603, 32
  %v718 = vpop.permute.xlu0 %717
  %719 = vrot.lane.b32.xlu0 %v604, 32
  %v720 = vpop.permute.xlu0 %719
  %721 = vrot.lane.b32.xlu0 %v605, 32
  %v722 = vpop.permute.xlu0 %721
  %723 = vrot.lane.b32.xlu0 %v600, 32
  %v724 = vpop.permute.xlu0 %723
  %vm731 = vcmask 588800
  %v732 = vsel %vm731, %v600, %v658
  %v733 = vsel %vm731, %v601, %v660
  %v734 = vsel %vm731, %v602, %v662
  %v735 = vsel %vm731, %v603, %v664
  %v736 = vsel %vm731, %v604, %v666
  %v737 = vsel %vm731, %v605, %v668
  %v738 = vsel %vm372, %v658, %v677
  %v739 = vsel %vm372, %v660, %v679
  %v740 = vsel %vm372, %v662, %v681
  %v741 = vsel %vm372, %v664, %v683
  %v742 = vsel %vm372, %v666, %v685
  %v743 = vsel %vm372, %v668, %v687
  %vm744 = vcmask 719872
  %v745 = vsel %vm744, %v738, %v696
  %v746 = vsel %vm744, %v739, %v698
  %v747 = vsel %vm744, %v740, %v700
  %v748 = vsel %vm744, %v741, %v702
  %v749 = vsel %vm744, %v742, %v704
  %v750 = vsel %vm744, %v743, %v706
  %vm751 = vcmask 261120
  %v752 = vsel %vm751, %v696, %v714
  %v753 = vsel %vm751, %v698, %v716
  %v754 = vsel %vm751, %v700, %v718
  %v755 = vsel %vm751, %v702, %v720
  %v756 = vsel %vm751, %v704, %v722
  %v757 = vsel %vm751, %v706, %v724
  %v758 = vpack.c.bf16 %v733, %v732
  %v759 = vpack.c.bf16 %v746, %v745
  %v760 = vpack.c.bf16 %v753, %v752
  %v761 = vpack.c.bf16 %v735, %v734
  %v762 = vpack.c.bf16 %v748, %v747
  %v763 = vpack.c.bf16 %v755, %v754
  %v764 = vpack.c.bf16 %v737, %v736
  %v765 = vpack.c.bf16 %v750, %v749
  %v766 = vpack.c.bf16 %v757, %v756
  %v767 = vld [vmem:[%s5] sm:$0xf]
  %v768 = vld [vmem:[%s5 + $0x4] sm:$0xf]
  %v769 = vld [vmem:[%s5 + $0x8] sm:$0xf]
  %v770 = vld [vmem:[%s5 + $0xc] sm:$0xf]
  %v771 = vld [vmem:[%s5 + $0x10] sm:$0xf]
  %v772 = vld [vmem:[%s5 + $0x14] sm:$0xf]
  %v773 = vld [vmem:[%s5 + $0x18] sm:$0xf]
  %v774 = vld [vmem:[%s5 + $0x1c] sm:$0xf]
  %v775 = vld [vmem:[%s5 + $0x20] sm:$0xf]
  %v776 = vld [vmem:[%s5 + $0x24] sm:$0xf]
  %v777 = vld [vmem:[%s5 + $0x28] sm:$0xf]
  %v778 = vld [vmem:[%s5 + $0x2c] sm:$0xf]
  %v779 = vld [vmem:[%s5 + $0x30] sm:$0xf]
  %v780 = vld [vmem:[%s5 + $0x34] sm:$0xf]
  %v781 = vld [vmem:[%s5 + $0x38] sm:$0xf]
  %v782 = vld [vmem:[%s5 + $0x3c] sm:$0xf]
  %v783 = vld [vmem:[%s5 + $0x40] sm:$0xf]
  %v784 = vld [vmem:[%s5 + $0x44] sm:$0xf]
  %v785 = vld [vmem:[%s5 + $0x48] sm:$0xf]
  %v786 = vld [vmem:[%s5 + $0x4c] sm:$0xf]
  %v787 = vld [vmem:[%s5 + $0x50] sm:$0xf]
  %v788 = vld [vmem:[%s5 + $0x54] sm:$0xf]
  %v789 = vld [vmem:[%s5 + $0x58] sm:$0xf]
  %v790 = vld [vmem:[%s5 + $0x5c] sm:$0xf]
  %v791 = vld [vmem:[%s5 + $0x60] sm:$0xf]
  %v792 = vld [vmem:[%s5 + $0x64] sm:$0xf]
  %v793 = vld [vmem:[%s5 + $0x68] sm:$0xf]
  %v794 = vld [vmem:[%s5 + $0x6c] sm:$0xf]
  %v795 = vld [vmem:[%s5 + $0x70] sm:$0xf]
  %v796 = vld [vmem:[%s5 + $0x74] sm:$0xf]
  %v797 = vld [vmem:[%s5 + $0x78] sm:$0xf]
  %v798 = vld [vmem:[%s5 + $0x7c] sm:$0xf]
  %v799 = vld [vmem:[%s5 + $0x80] sm:$0xf]
  %v800 = vld [vmem:[%s5 + $0x84] sm:$0xf]
  %v801 = vld [vmem:[%s5 + $0x88] sm:$0xf]
  %v802 = vld [vmem:[%s5 + $0x8c] sm:$0xf]
  %v803 = vld [vmem:[%s5 + $0x90] sm:$0xf]
  %v804 = vld [vmem:[%s5 + $0x94] sm:$0xf]
  %v805 = vld [vmem:[%s5 + $0x98] sm:$0xf]
  %v806 = vld [vmem:[%s5 + $0x9c] sm:$0xf]
  %v807 = vld [vmem:[%s5 + $0xa0] sm:$0xf]
  %v808 = vld [vmem:[%s5 + $0xa4] sm:$0xf]
  %v809 = vld [vmem:[%s5 + $0xa8] sm:$0xf]
  %v810 = vld [vmem:[%s5 + $0xac] sm:$0xf]
  %v811 = vld [vmem:[%s5 + $0xb0] sm:$0xf]
  %v812 = vld [vmem:[%s6] sm:$0x1]
  %v814 = vlaneseq
  %v815 = vshrl.u32 %v814, 7
  %v816 = vsub.s32 0, %v815
  %v817 = vrot.slane %v812, %v816
  %v864 = vunpack.c.l.b16 %v767
  %v865 = vunpack.c.l.b16 %v768
  %v866 = vunpack.c.l.b16 %v769
  %v867 = vunpack.c.l.b16 %v770
  %v868 = vunpack.c.l.b16 %v771
  %v869 = vunpack.c.l.b16 %v772
  %v870 = vunpack.c.l.b16 %v773
  %v871 = vunpack.c.l.b16 %v774
  %v872 = vunpack.c.l.b16 %v775
  %v873 = vunpack.c.l.b16 %v776
  %v874 = vunpack.c.l.b16 %v777
  %v875 = vunpack.c.l.b16 %v778
  %v876 = vunpack.c.l.b16 %v779
  %v877 = vunpack.c.l.b16 %v780
  %v878 = vunpack.c.l.b16 %v781
  %v879 = vunpack.c.l.b16 %v782
  %v880 = vunpack.c.l.b16 %v783
  %v881 = vunpack.c.l.b16 %v784
  %v882 = vunpack.c.l.b16 %v785
  %v883 = vunpack.c.l.b16 %v786
  %v884 = vunpack.c.l.b16 %v787
  %v885 = vunpack.c.l.b16 %v788
  %v886 = vunpack.c.l.b16 %v789
  %v887 = vunpack.c.l.b16 %v790
  %v888 = vunpack.c.l.b16 %v791
  %v889 = vunpack.c.l.b16 %v792
  %v890 = vunpack.c.l.b16 %v793
  %v891 = vunpack.c.l.b16 %v794
  %v892 = vunpack.c.l.b16 %v795
  %v893 = vunpack.c.l.b16 %v796
  %v894 = vunpack.c.l.b16 %v797
  %v895 = vunpack.c.l.b16 %v798
  %v896 = vunpack.c.l.b16 %v799
  %v897 = vunpack.c.l.b16 %v800
  %v898 = vunpack.c.l.b16 %v801
  %v899 = vunpack.c.l.b16 %v802
  %v900 = vunpack.c.l.b16 %v803
  %v901 = vunpack.c.l.b16 %v804
  %v902 = vunpack.c.l.b16 %v805
  %v903 = vunpack.c.l.b16 %v806
  %v904 = vunpack.c.l.b16 %v807
  %v905 = vunpack.c.l.b16 %v808
  %v906 = vunpack.c.l.b16 %v809
  %v907 = vunpack.c.l.b16 %v810
  %v908 = vunpack.c.l.b16 %v811
  %v909 = vpack.c.b16 %v865, %v864
  %v910 = vpack.c.b16 %v867, %v866
  %v911 = vpack.c.b16 %v869, %v868
  %v912 = vpack.c.b16 %v871, %v870
  %v913 = vpack.c.b16 %v873, %v872
  %v914 = vpack.c.b16 %v875, %v874
  %v915 = vpack.c.b16 %v877, %v876
  %v916 = vpack.c.b16 %v879, %v878
  %v917 = vpack.c.b16 %v881, %v880
  %v918 = vpack.c.b16 %v883, %v882
  %v919 = vpack.c.b16 %v885, %v884
  %v920 = vpack.c.b16 %v887, %v886
  %v921 = vpack.c.b16 %v889, %v888
  %v922 = vpack.c.b16 %v891, %v890
  %v923 = vpack.c.b16 %v893, %v892
  %v924 = vpack.c.b16 %v895, %v894
  %v925 = vpack.c.b16 %v897, %v896
  %v926 = vpack.c.b16 %v899, %v898
  %v927 = vpack.c.b16 %v901, %v900
  %v928 = vpack.c.b16 %v903, %v902
  %v929 = vpack.c.b16 %v905, %v904
  %v930 = vpack.c.b16 %v907, %v906
  %v931 = vpack.c.b16 %v908, %v908
  %vm954 = vcmask 850944
  %v956 = vsel %vm954, %v760, 0
  %v959 = vsel %vm954, %v763, 0
  %v962 = vsel %vm954, %v766, 0
  %v965 = vsel %vm626, %v931, 0
  %967 = vmatprep.subr.bf16.mxu0 0
  %968 = vmatpush1.bf16.msra.mxu0 %v909
  %969 = vmatprep.subr.bf16.mxu0 0
  %970 = vmatpush1.bf16.msra.mxu0 %v910
  %971 = vmatprep.subr.bf16.mxu0 0
  %972 = vmatpush1.bf16.msra.mxu0 %v911
  %973 = vmatprep.subr.bf16.mxu0 0
  %974 = vmatpush1.bf16.msra.mxu0 %v912
  %975 = vmatprep.subr.bf16.mxu0 0
  %976 = vmatpush1.bf16.msra.mxu0 %v913
  %977 = vmatprep.subr.bf16.mxu0 0
  %978 = vmatpush1.bf16.msra.mxu0 %v914
  %979 = vmatprep.subr.bf16.mxu0 0
  %980 = vmatpush1.bf16.msra.mxu0 %v915
  %981 = vmatprep.subr.bf16.mxu0 0
  %982 = vmatpush1.bf16.msra.mxu0 %v916
  %983 = vmatprep.subr.bf16.mxu0 0
  %984 = vmatpush1.bf16.msra.mxu0 %v917
  %985 = vmatprep.subr.bf16.mxu0 0
  %986 = vmatpush1.bf16.msra.mxu0 %v918
  %987 = vmatprep.subr.bf16.mxu0 0
  %988 = vmatpush1.bf16.msra.mxu0 %v919
  %989 = vmatprep.subr.bf16.mxu0 0
  %990 = vmatpush1.bf16.msra.mxu0 %v920
  %991 = vmatprep.subr.bf16.mxu0 0
  %992 = vmatpush1.bf16.msra.mxu0 %v921
  %993 = vmatprep.subr.bf16.mxu0 0
  %994 = vmatpush1.bf16.msra.mxu0 %v922
  %995 = vmatprep.subr.bf16.mxu0 0
  %996 = vmatpush1.bf16.msra.mxu0 %v923
  %997 = vmatprep.subr.bf16.mxu0 0
  %998 = vmatpush1.bf16.msra.mxu0 %v924
  %999 = vmatprep.mubr.bf16.mxu0 %v759
  %1000 = vmatmul.mubr.bf16.gmra.mrb[0].mxu0 %v758
  %v1001 = vpop.f32.mrb[0].mxu0
  %v1002 = vadd.f32 %v817, %v1001
  %v1003 = vpop.f32.mrb[0].mxu0
  %v1004 = vpop.f32.mrb[0].mxu0
  %v1005 = vadd.f32 %v817, %v1004
  %v1006 = vpop.f32.mrb[0].mxu0
  %1007 = vmatprep.mubr.bf16.mxu0 %v762
  %1008 = vmatmul.mubr.bf16.gmra.mrb[0].mxu0 %v761
  %v1009 = vpop.f32.mrb[0].mxu0
  %v1010 = vadd.f32 %v817, %v1009
  %v1011 = vpop.f32.mrb[0].mxu0
  %v1012 = vpop.f32.mrb[0].mxu0
  %v1013 = vadd.f32 %v817, %v1012
  %v1014 = vpop.f32.mrb[0].mxu0
  %1015 = vmatprep.mubr.bf16.mxu0 %v765
  %1016 = vmatmul.mubr.bf16.gmra.mrb[0].mxu0 %v764
  %v1017 = vpop.f32.mrb[0].mxu0
  %v1018 = vadd.f32 %v817, %v1017
  %v1019 = vpop.f32.mrb[0].mxu0
  %v1020 = vpop.f32.mrb[0].mxu0
  %v1021 = vadd.f32 %v817, %v1020
  %v1022 = vpop.f32.mrb[0].mxu0
  %1023 = vdwg.mxu0
  %1024 = vmatprep.subr.bf16.mxu0 0
  %1025 = vmatpush1.bf16.msra.mxu0 %v925
  %1026 = vmatprep.subr.bf16.mxu0 0
  %1027 = vmatpush1.bf16.msra.mxu0 %v926
  %1028 = vmatprep.subr.bf16.mxu0 0
  %1029 = vmatpush1.bf16.msra.mxu0 %v927
  %1030 = vmatprep.subr.bf16.mxu0 0
  %1031 = vmatpush1.bf16.msra.mxu0 %v928
  %1032 = vmatprep.subr.bf16.mxu0 0
  %1033 = vmatpush1.bf16.msra.mxu0 %v929
  %1034 = vmatprep.subr.bf16.mxu0 0
  %1035 = vmatpush1.bf16.msra.mxu0 %v930
  %1036 = vmatprep.subr.bf16.mxu0 0
  %1037 = vmatpush1.bf16.msra.mxu0 %v965
  %1038 = vmatprep.subr.bf16.mxu0 0
  %1039 = vmatpush1.bf16.msra.mxu0 0
  %1040 = vmatprep.subr.bf16.mxu0 0
  %1041 = vmatpush1.bf16.msra.mxu0 0
  %1042 = vmatprep.subr.bf16.mxu0 0
  %1043 = vmatpush1.bf16.msra.mxu0 0
  %1044 = vmatprep.subr.bf16.mxu0 0
  %1045 = vmatpush1.bf16.msra.mxu0 0
  %1046 = vmatprep.subr.bf16.mxu0 0
  %1047 = vmatpush1.bf16.msra.mxu0 0
  %1048 = vmatprep.subr.bf16.mxu0 0
  %1049 = vmatpush1.bf16.msra.mxu0 0
  %1050 = vmatprep.subr.bf16.mxu0 0
  %1051 = vmatpush1.bf16.msra.mxu0 0
  %1052 = vmatprep.subr.bf16.mxu0 0
  %1053 = vmatpush1.bf16.msra.mxu0 0
  %1054 = vmatprep.subr.bf16.mxu0 0
  %1055 = vmatpush1.bf16.msra.mxu0 0
  %1056 = vmatprep.mubr.bf16.mxu0 0
  %1057 = vmatmul.mubr.bf16.gmra.mrb[0].mxu0 %v956
  %v1058 = vpop.f32.mrb[0].mxu0
  %v1059 = vadd.f32 %v1002, %v1058
  %v1060 = vpop.f32.mrb[0].mxu0
  %v1061 = vpop.f32.mrb[0].mxu0
  %v1062 = vadd.f32 %v1005, %v1061
  %v1063 = vpop.f32.mrb[0].mxu0
  %1064 = vmatprep.mubr.bf16.mxu0 0
  %1065 = vmatmul.mubr.bf16.gmra.mrb[0].mxu0 %v959
  %v1066 = vpop.f32.mrb[0].mxu0
  %v1067 = vadd.f32 %v1010, %v1066
  %v1068 = vpop.f32.mrb[0].mxu0
  %v1069 = vpop.f32.mrb[0].mxu0
  %v1070 = vadd.f32 %v1013, %v1069
  %v1071 = vpop.f32.mrb[0].mxu0
  %1072 = vmatprep.mubr.bf16.mxu0 0
  %1073 = vmatmul.mubr.bf16.gmra.mrb[0].mxu0 %v962
  %v1074 = vpop.f32.mrb[0].mxu0
  %v1075 = vadd.f32 %v1018, %v1074
  %v1076 = vpop.f32.mrb[0].mxu0
  %v1077 = vpop.f32.mrb[0].mxu0
  %v1078 = vadd.f32 %v1021, %v1077
  %v1079 = vpop.f32.mrb[0].mxu0
  %1080 = vdwg.mxu0
  %v1081 = vmax.f32 %v1059, 0.0
  %v1082 = vmax.f32 %v1062, 0.0
  %v1083 = vmax.f32 %v1067, 0.0
  %v1084 = vmax.f32 %v1070, 0.0
  %v1085 = vmax.f32 %v1075, 0.0
  %v1086 = vmax.f32 %v1078, 0.0
  %v1087 = vpack.c.bf16 %v1082, %v1081
  %v1088 = vpack.c.bf16 %v1084, %v1083
  %v1089 = vpack.c.bf16 %v1086, %v1085
  %v1090 = vld [vmem:[%s7] sm:$0xf]
  %v1091 = vld [vmem:[%s7 + $0x4] sm:$0xf]
  %v1092 = vld [vmem:[%s7 + $0x8] sm:$0xf]
  %v1093 = vld [vmem:[%s7 + $0xc] sm:$0xf]
  %v1094 = vld [vmem:[%s7 + $0x10] sm:$0xf]
  %v1095 = vld [vmem:[%s7 + $0x14] sm:$0xf]
  %v1096 = vld [vmem:[%s7 + $0x18] sm:$0xf]
  %v1097 = vld [vmem:[%s7 + $0x1c] sm:$0xf]
  %v1098 = vld [vmem:[%s7 + $0x20] sm:$0xf]
  %v1099 = vld [vmem:[%s7 + $0x24] sm:$0xf]
  %v1100 = vld [vmem:[%s7 + $0x28] sm:$0xf]
  %v1101 = vld [vmem:[%s7 + $0x2c] sm:$0xf]
  %v1102 = vld [vmem:[%s7 + $0x30] sm:$0xf]
  %v1103 = vld [vmem:[%s7 + $0x34] sm:$0xf]
  %v1104 = vld [vmem:[%s7 + $0x38] sm:$0xf]
  %v1105 = vld [vmem:[%s7 + $0x3c] sm:$0xf]
  %v1122 = vunpack.c.l.b16 %v1090
  %v1123 = vunpack.c.l.b16 %v1091
  %v1124 = vunpack.c.l.b16 %v1092
  %v1125 = vunpack.c.l.b16 %v1093
  %v1126 = vunpack.c.l.b16 %v1094
  %v1127 = vunpack.c.l.b16 %v1095
  %v1128 = vunpack.c.l.b16 %v1096
  %v1129 = vunpack.c.l.b16 %v1097
  %v1130 = vunpack.c.l.b16 %v1098
  %v1131 = vunpack.c.l.b16 %v1099
  %v1132 = vunpack.c.l.b16 %v1100
  %v1133 = vunpack.c.l.b16 %v1101
  %v1134 = vunpack.c.l.b16 %v1102
  %v1135 = vunpack.c.l.b16 %v1103
  %v1136 = vunpack.c.l.b16 %v1104
  %v1137 = vunpack.c.l.b16 %v1105
  %v1138 = vpack.c.b16 %v1123, %v1122
  %v1139 = vpack.c.b16 %v1125, %v1124
  %v1140 = vpack.c.b16 %v1127, %v1126
  %v1141 = vpack.c.b16 %v1129, %v1128
  %v1142 = vpack.c.b16 %v1131, %v1130
  %v1143 = vpack.c.b16 %v1133, %v1132
  %v1144 = vpack.c.b16 %v1135, %v1134
  %v1145 = vpack.c.b16 %v1137, %v1136
  %1154 = vmatprep.subr.bf16.mxu0 0
  %1155 = vmatpush1.bf16.msra.mxu0 %v1138
  %1156 = vmatprep.subr.bf16.mxu0 0
  %1157 = vmatpush1.bf16.msra.mxu0 %v1139
  %1158 = vmatprep.subr.bf16.mxu0 0
  %1159 = vmatpush1.bf16.msra.mxu0 %v1140
  %1160 = vmatprep.subr.bf16.mxu0 0
  %1161 = vmatpush1.bf16.msra.mxu0 %v1141
  %1162 = vmatprep.subr.bf16.mxu0 0
  %1163 = vmatpush1.bf16.msra.mxu0 %v1142
  %1164 = vmatprep.subr.bf16.mxu0 0
  %1165 = vmatpush1.bf16.msra.mxu0 %v1143
  %1166 = vmatprep.subr.bf16.mxu0 0
  %1167 = vmatpush1.bf16.msra.mxu0 %v1144
  %1168 = vmatprep.subr.bf16.mxu0 0
  %1169 = vmatpush1.bf16.msra.mxu0 %v1145
  %1170 = vmatprep.subr.bf16.mxu0 0
  %1171 = vmatpush1.bf16.msra.mxu0 0
  %1172 = vmatprep.subr.bf16.mxu0 0
  %1173 = vmatpush1.bf16.msra.mxu0 0
  %1174 = vmatprep.subr.bf16.mxu0 0
  %1175 = vmatpush1.bf16.msra.mxu0 0
  %1176 = vmatprep.subr.bf16.mxu0 0
  %1177 = vmatpush1.bf16.msra.mxu0 0
  %1178 = vmatprep.subr.bf16.mxu0 0
  %1179 = vmatpush1.bf16.msra.mxu0 0
  %1180 = vmatprep.subr.bf16.mxu0 0
  %1181 = vmatpush1.bf16.msra.mxu0 0
  %1182 = vmatprep.subr.bf16.mxu0 0
  %1183 = vmatpush1.bf16.msra.mxu0 0
  %1184 = vmatprep.subr.bf16.mxu0 0
  %1185 = vmatpush1.bf16.msra.mxu0 0
  %1186 = vmatprep.mubr.bf16.mxu0 0
  %1187 = vmatmul.mubr.bf16.gmra.mrb[0].mxu0 %v1087
  %v1188 = vpop.f32.mrb[0].mxu0
  %v1189 = vadd.f32 0.0, %v1188
  %v1190 = vpop.f32.mrb[0].mxu0
  %v1191 = vpop.f32.mrb[0].mxu0
  %v1192 = vadd.f32 0.0, %v1191
  %v1193 = vpop.f32.mrb[0].mxu0
  %1194 = vmatprep.mubr.bf16.mxu0 0
  %1195 = vmatmul.mubr.bf16.gmra.mrb[0].mxu0 %v1088
  %v1196 = vpop.f32.mrb[0].mxu0
  %v1197 = vadd.f32 0.0, %v1196
  %v1198 = vpop.f32.mrb[0].mxu0
  %v1199 = vpop.f32.mrb[0].mxu0
  %v1200 = vadd.f32 0.0, %v1199
  %v1201 = vpop.f32.mrb[0].mxu0
  %1202 = vmatprep.mubr.bf16.mxu0 0
  %1203 = vmatmul.mubr.bf16.gmra.mrb[0].mxu0 %v1089
  %v1204 = vpop.f32.mrb[0].mxu0
  %v1205 = vadd.f32 0.0, %v1204
  %v1206 = vpop.f32.mrb[0].mxu0
  %v1207 = vpop.f32.mrb[0].mxu0
  %v1208 = vadd.f32 0.0, %v1207
  %v1209 = vpop.f32.mrb[0].mxu0
  %1210 = vdwg.mxu0
  %v1211 = vld [vmem:[%s8] sm:$0xf]
  %v1212 = vld [vmem:[%s8 + $0x4] sm:$0xf]
  %v1213 = vld [vmem:[%s8 + $0x8] sm:$0xf]
  %v1214 = vld [vmem:[%s8 + $0xc] sm:$0xf]
  %v1215 = vld [vmem:[%s8 + $0x10] sm:$0xf]
  %v1216 = vld [vmem:[%s8 + $0x14] sm:$0xf]
  %v1217 = vld [vmem:[%s8 + $0x18] sm:$0xf]
  %v1218 = vld [vmem:[%s8 + $0x1c] sm:$0xf]
  %v1219 = vld [vmem:[%s8 + $0x20] sm:$0xf]
  %v1220 = vld [vmem:[%s8 + $0x24] sm:$0xf]
  %v1221 = vld [vmem:[%s8 + $0x28] sm:$0xf]
  %v1222 = vld [vmem:[%s8 + $0x2c] sm:$0xf]
  %v1223 = vld [vmem:[%s8 + $0x30] sm:$0xf]
  %v1224 = vld [vmem:[%s8 + $0x34] sm:$0xf]
  %v1225 = vld [vmem:[%s8 + $0x38] sm:$0xf]
  %v1226 = vld [vmem:[%s8 + $0x3c] sm:$0xf]
  %v1243 = vunpack.c.l.b16 %v1211
  %v1244 = vunpack.c.l.b16 %v1212
  %v1245 = vunpack.c.l.b16 %v1213
  %v1246 = vunpack.c.l.b16 %v1214
  %v1247 = vunpack.c.l.b16 %v1215
  %v1248 = vunpack.c.l.b16 %v1216
  %v1249 = vunpack.c.l.b16 %v1217
  %v1250 = vunpack.c.l.b16 %v1218
  %v1251 = vunpack.c.l.b16 %v1219
  %v1252 = vunpack.c.l.b16 %v1220
  %v1253 = vunpack.c.l.b16 %v1221
  %v1254 = vunpack.c.l.b16 %v1222
  %v1255 = vunpack.c.l.b16 %v1223
  %v1256 = vunpack.c.l.b16 %v1224
  %v1257 = vunpack.c.l.b16 %v1225
  %v1258 = vunpack.c.l.b16 %v1226
  %v1259 = vpack.c.b16 %v1244, %v1243
  %v1260 = vpack.c.b16 %v1246, %v1245
  %v1261 = vpack.c.b16 %v1248, %v1247
  %v1262 = vpack.c.b16 %v1250, %v1249
  %v1263 = vpack.c.b16 %v1252, %v1251
  %v1264 = vpack.c.b16 %v1254, %v1253
  %v1265 = vpack.c.b16 %v1256, %v1255
  %v1266 = vpack.c.b16 %v1258, %v1257
  %1275 = vmatprep.subr.bf16.mxu0 0
  %1276 = vmatpush1.bf16.msra.mxu0 %v1259
  %1277 = vmatprep.subr.bf16.mxu0 0
  %1278 = vmatpush1.bf16.msra.mxu0 %v1260
  %1279 = vmatprep.subr.bf16.mxu0 0
  %1280 = vmatpush1.bf16.msra.mxu0 %v1261
  %1281 = vmatprep.subr.bf16.mxu0 0
  %1282 = vmatpush1.bf16.msra.mxu0 %v1262
  %1283 = vmatprep.subr.bf16.mxu0 0
  %1284 = vmatpush1.bf16.msra.mxu0 %v1263
  %1285 = vmatprep.subr.bf16.mxu0 0
  %1286 = vmatpush1.bf16.msra.mxu0 %v1264
  %1287 = vmatprep.subr.bf16.mxu0 0
  %1288 = vmatpush1.bf16.msra.mxu0 %v1265
  %1289 = vmatprep.subr.bf16.mxu0 0
  %1290 = vmatpush1.bf16.msra.mxu0 %v1266
  %1291 = vmatprep.subr.bf16.mxu0 0
  %1292 = vmatpush1.bf16.msra.mxu0 0
  %1293 = vmatprep.subr.bf16.mxu0 0
  %1294 = vmatpush1.bf16.msra.mxu0 0
  %1295 = vmatprep.subr.bf16.mxu0 0
  %1296 = vmatpush1.bf16.msra.mxu0 0
  %1297 = vmatprep.subr.bf16.mxu0 0
  %1298 = vmatpush1.bf16.msra.mxu0 0
  %1299 = vmatprep.subr.bf16.mxu0 0
  %1300 = vmatpush1.bf16.msra.mxu0 0
  %1301 = vmatprep.subr.bf16.mxu0 0
  %1302 = vmatpush1.bf16.msra.mxu0 0
  %1303 = vmatprep.subr.bf16.mxu0 0
  %1304 = vmatpush1.bf16.msra.mxu0 0
  %1305 = vmatprep.subr.bf16.mxu0 0
  %1306 = vmatpush1.bf16.msra.mxu0 0
  %1307 = vmatprep.mubr.bf16.mxu0 0
  %1308 = vmatmul.mubr.bf16.gmra.mrb[0].mxu0 %v1087
  %v1309 = vpop.f32.mrb[0].mxu0
  %v1310 = vadd.f32 0.0, %v1309
  %v1311 = vpop.f32.mrb[0].mxu0
  %v1312 = vpop.f32.mrb[0].mxu0
  %v1313 = vadd.f32 0.0, %v1312
  %v1314 = vpop.f32.mrb[0].mxu0
  %1315 = vmatprep.mubr.bf16.mxu0 0
  %1316 = vmatmul.mubr.bf16.gmra.mrb[0].mxu0 %v1088
  %v1317 = vpop.f32.mrb[0].mxu0
  %v1318 = vadd.f32 0.0, %v1317
  %v1319 = vpop.f32.mrb[0].mxu0
  %v1320 = vpop.f32.mrb[0].mxu0
  %v1321 = vadd.f32 0.0, %v1320
  %v1322 = vpop.f32.mrb[0].mxu0
  %1323 = vmatprep.mubr.bf16.mxu0 0
  %1324 = vmatmul.mubr.bf16.gmra.mrb[0].mxu0 %v1089
  %v1325 = vpop.f32.mrb[0].mxu0
  %v1326 = vadd.f32 0.0, %v1325
  %v1327 = vpop.f32.mrb[0].mxu0
  %v1328 = vpop.f32.mrb[0].mxu0
  %v1329 = vadd.f32 0.0, %v1328
  %v1330 = vpop.f32.mrb[0].mxu0
  %1331 = vdwg.mxu0
  %v1332 = vmax.f32 %v1189, %v1310
  %v1333 = vmax.f32 %v1192, %v1313
  %v1334 = vmax.f32 %v1197, %v1318
  %v1335 = vmax.f32 %v1200, %v1321
  %v1336 = vmax.f32 %v1205, %v1326
  %v1337 = vmax.f32 %v1208, %v1329
  %v1344 = vrot.slane %v1332, 2
  %v1345 = vrot.slane %v1333, 2
  %v1346 = vsel %vm212, %v1344, %v1345
  %v1347 = vrot.slane %v1334, 2
  %v1348 = vsel %vm212, %v1345, %v1347
  %v1349 = vrot.slane %v1335, 2
  %v1350 = vsel %vm212, %v1347, %v1349
  %v1351 = vrot.slane %v1336, 2
  %v1352 = vsel %vm212, %v1349, %v1351
  %v1353 = vrot.slane %v1337, 2
  %v1354 = vsel %vm212, %v1351, %v1353
  %v1362 = vsel %vm212, %v1353, %v1344
  %v1363 = vmax.f32 %v1332, %v1346
  %v1364 = vmax.f32 %v1333, %v1348
  %v1365 = vmax.f32 %v1334, %v1350
  %v1366 = vmax.f32 %v1335, %v1352
  %v1367 = vmax.f32 %v1336, %v1354
  %v1368 = vmax.f32 %v1337, %v1362
  %v1375 = vrot.slane %v1363, 4
  %v1376 = vrot.slane %v1364, 4
  %v1377 = vsel %vm626, %v1375, %v1376
  %v1378 = vrot.slane %v1365, 4
  %v1379 = vsel %vm626, %v1376, %v1378
  %v1380 = vrot.slane %v1366, 4
  %v1381 = vsel %vm626, %v1378, %v1380
  %v1382 = vrot.slane %v1367, 4
  %v1383 = vsel %vm626, %v1380, %v1382
  %v1384 = vrot.slane %v1368, 4
  %v1385 = vsel %vm626, %v1382, %v1384
  %v1388 = vsel %vm626, %v1384, %v1375
  %1390 = vrot.lane.b32.xlu0 %v1377, 64
  %v1391 = vpop.permute.xlu0 %1390
  %1392 = vrot.lane.b32.xlu0 %v1379, 64
  %v1393 = vpop.permute.xlu0 %1392
  %1394 = vrot.lane.b32.xlu0 %v1381, 64
  %v1395 = vpop.permute.xlu0 %1394
  %1396 = vrot.lane.b32.xlu0 %v1383, 64
  %v1397 = vpop.permute.xlu0 %1396
  %1398 = vrot.lane.b32.xlu0 %v1385, 64
  %v1399 = vpop.permute.xlu0 %1398
  %1400 = vrot.lane.b32.xlu0 %v1388, 64
  %v1401 = vpop.permute.xlu0 %1400
  %vm1408 = vcmask 523264
  %v1409 = vsel %vm1408, %v1363, %v1391
  %v1410 = vsel %vm1408, %v1364, %v1393
  %v1411 = vsel %vm1408, %v1365, %v1395
  %v1412 = vsel %vm1408, %v1366, %v1397
  %v1413 = vsel %vm1408, %v1367, %v1399
  %v1414 = vsel %vm1408, %v1368, %v1401
  %v1415 = vpack.c.bf16 %v1410, %v1409
  %v1416 = vpack.c.bf16 %v1411, %v1410
  %v1417 = vpack.c.bf16 %v1412, %v1411
  %v1418 = vpack.c.bf16 %v1413, %v1412
  %v1419 = vpack.c.bf16 %v1414, %v1413
  %v1420 = vpack.c.bf16 %v1409, %v1414
  %v1421 = vld [vmem:[%s9] sm:$0xf]
  %v1422 = vld [vmem:[%s9 + $0x4] sm:$0xf]
  %v1423 = vld [vmem:[%s9 + $0x8] sm:$0xf]
  %v1424 = vld [vmem:[%s9 + $0xc] sm:$0xf]
  %v1425 = vld [vmem:[%s9 + $0x10] sm:$0xf]
  %v1426 = vld [vmem:[%s9 + $0x14] sm:$0xf]
  %v1427 = vld [vmem:[%s9 + $0x18] sm:$0xf]
  %v1428 = vld [vmem:[%s9 + $0x1c] sm:$0xf]
  %v1429 = vld [vmem:[%s9 + $0x20] sm:$0xf]
  %v1430 = vld [vmem:[%s9 + $0x24] sm:$0xf]
  %v1431 = vld [vmem:[%s9 + $0x28] sm:$0xf]
  %v1432 = vld [vmem:[%s9 + $0x2c] sm:$0xf]
  %v1433 = vld [vmem:[%s9 + $0x30] sm:$0xf]
  %v1434 = vld [vmem:[%s9 + $0x34] sm:$0xf]
  %v1435 = vld [vmem:[%s9 + $0x38] sm:$0xf]
  %v1436 = vld [vmem:[%s9 + $0x3c] sm:$0xf]
  %v1437 = vld [vmem:[%s9 + $0x40] sm:$0xf]
  %v1438 = vld [vmem:[%s9 + $0x44] sm:$0xf]
  %v1439 = vld [vmem:[%s9 + $0x48] sm:$0xf]
  %v1440 = vld [vmem:[%s9 + $0x4c] sm:$0xf]
  %v1441 = vld [vmem:[%s9 + $0x50] sm:$0xf]
  %v1442 = vld [vmem:[%s9 + $0x54] sm:$0xf]
  %v1443 = vld [vmem:[%s9 + $0x58] sm:$0xf]
  %v1444 = vld [vmem:[%s9 + $0x5c] sm:$0xf]
  %v1445 = vld [vmem:[%s9 + $0x60] sm:$0xf]
  %v1446 = vld [vmem:[%s9 + $0x64] sm:$0xf]
  %v1447 = vld [vmem:[%s9 + $0x68] sm:$0xf]
  %v1448 = vld [vmem:[%s9 + $0x6c] sm:$0xf]
  %v1449 = vld [vmem:[%s9 + $0x70] sm:$0xf]
  %v1450 = vld [vmem:[%s9 + $0x74] sm:$0xf]
  %v1451 = vld [vmem:[%s9 + $0x78] sm:$0xf]
  %v1452 = vld [vmem:[%s9 + $0x7c] sm:$0xf]
  %v1453 = vld [vmem:[%s10] sm:$0x1]
  %v1455 = vlaneseq
  %v1456 = vshrl.u32 %v1455, 7
  %v1457 = vsub.s32 0, %v1456
  %v1458 = vrot.slane %v1453, %v1457
  %v1492 = vunpack.c.l.b16 %v1421
  %v1493 = vunpack.c.l.b16 %v1422
  %v1494 = vunpack.c.l.b16 %v1423
  %v1495 = vunpack.c.l.b16 %v1424
  %v1496 = vunpack.c.l.b16 %v1425
  %v1497 = vunpack.c.l.b16 %v1426
  %v1498 = vunpack.c.l.b16 %v1427
  %v1499 = vunpack.c.l.b16 %v1428
  %v1500 = vunpack.c.l.b16 %v1429
  %v1501 = vunpack.c.l.b16 %v1430
  %v1502 = vunpack.c.l.b16 %v1431
  %v1503 = vunpack.c.l.b16 %v1432
  %v1504 = vunpack.c.l.b16 %v1433
  %v1505 = vunpack.c.l.b16 %v1434
  %v1506 = vunpack.c.l.b16 %v1435
  %v1507 = vunpack.c.l.b16 %v1436
  %v1508 = vunpack.c.l.b16 %v1437
  %v1509 = vunpack.c.l.b16 %v1438
  %v1510 = vunpack.c.l.b16 %v1439
  %v1511 = vunpack.c.l.b16 %v1440
  %v1512 = vunpack.c.l.b16 %v1441
  %v1513 = vunpack.c.l.b16 %v1442
  %v1514 = vunpack.c.l.b16 %v1443
  %v1515 = vunpack.c.l.b16 %v1444
  %v1516 = vunpack.c.l.b16 %v1445
  %v1517 = vunpack.c.l.b16 %v1446
  %v1518 = vunpack.c.l.b16 %v1447
  %v1519 = vunpack.c.l.b16 %v1448
  %v1520 = vunpack.c.l.b16 %v1449
  %v1521 = vunpack.c.l.b16 %v1450
  %v1522 = vunpack.c.l.b16 %v1451
  %v1523 = vunpack.c.l.b16 %v1452
  %v1524 = vpack.c.b16 %v1493, %v1492
  %v1525 = vpack.c.b16 %v1495, %v1494
  %v1526 = vpack.c.b16 %v1497, %v1496
  %v1527 = vpack.c.b16 %v1499, %v1498
  %v1528 = vpack.c.b16 %v1501, %v1500
  %v1529 = vpack.c.b16 %v1503, %v1502
  %v1530 = vpack.c.b16 %v1505, %v1504
  %v1531 = vpack.c.b16 %v1507, %v1506
  %v1532 = vpack.c.b16 %v1509, %v1508
  %v1533 = vpack.c.b16 %v1511, %v1510
  %v1534 = vpack.c.b16 %v1513, %v1512
  %v1535 = vpack.c.b16 %v1515, %v1514
  %v1536 = vpack.c.b16 %v1517, %v1516
  %v1537 = vpack.c.b16 %v1519, %v1518
  %v1538 = vpack.c.b16 %v1521, %v1520
  %v1539 = vpack.c.b16 %v1523, %v1522
  %1556 = vmatprep.subr.bf16.mxu0 0
  %1557 = vmatpush1.bf16.msra.mxu0 %v1524
  %1558 = vmatprep.subr.bf16.mxu0 0
  %1559 = vmatpush1.bf16.msra.mxu0 %v1525
  %1560 = vmatprep.subr.bf16.mxu0 0
  %1561 = vmatpush1.bf16.msra.mxu0 %v1526
  %1562 = vmatprep.subr.bf16.mxu0 0
  %1563 = vmatpush1.bf16.msra.mxu0 %v1527
  %1564 = vmatprep.subr.bf16.mxu0 0
  %1565 = vmatpush1.bf16.msra.mxu0 %v1528
  %1566 = vmatprep.subr.bf16.mxu0 0
  %1567 = vmatpush1.bf16.msra.mxu0 %v1529
  %1568 = vmatprep.subr.bf16.mxu0 0
  %1569 = vmatpush1.bf16.msra.mxu0 %v1530
  %1570 = vmatprep.subr.bf16.mxu0 0
  %1571 = vmatpush1.bf16.msra.mxu0 %v1531
  %1572 = vmatprep.subr.bf16.mxu0 0
  %1573 = vmatpush1.bf16.msra.mxu0 %v1532
  %1574 = vmatprep.subr.bf16.mxu0 0
  %1575 = vmatpush1.bf16.msra.mxu0 %v1533
  %1576 = vmatprep.subr.bf16.mxu0 0
  %1577 = vmatpush1.bf16.msra.mxu0 %v1534
  %1578 = vmatprep.subr.bf16.mxu0 0
  %1579 = vmatpush1.bf16.msra.mxu0 %v1535
  %1580 = vmatprep.subr.bf16.mxu0 0
  %1581 = vmatpush1.bf16.msra.mxu0 %v1536
  %1582 = vmatprep.subr.bf16.mxu0 0
  %1583 = vmatpush1.bf16.msra.mxu0 %v1537
  %1584 = vmatprep.subr.bf16.mxu0 0
  %1585 = vmatpush1.bf16.msra.mxu0 %v1538
  %1586 = vmatprep.subr.bf16.mxu0 0
  %1587 = vmatpush1.bf16.msra.mxu0 %v1539
  %1588 = vmatprep.mubr.bf16.mxu0 %v1416
  %1589 = vmatmul.mubr.bf16.gmra.mrb[0].mxu0 %v1415
  %v1590 = vpop.f32.mrb[0].mxu0
  %v1591 = vadd.f32 %v1458, %v1590
  %v1592 = vpop.f32.mrb[0].mxu0
  %v1593 = vpop.f32.mrb[0].mxu0
  %v1594 = vadd.f32 %v1458, %v1593
  %v1595 = vpop.f32.mrb[0].mxu0
  %1596 = vmatprep.mubr.bf16.mxu0 %v1418
  %1597 = vmatmul.mubr.bf16.gmra.mrb[0].mxu0 %v1417
  %v1598 = vpop.f32.mrb[0].mxu0
  %v1599 = vadd.f32 %v1458, %v1598
  %v1600 = vpop.f32.mrb[0].mxu0
  %v1601 = vpop.f32.mrb[0].mxu0
  %v1602 = vadd.f32 %v1458, %v1601
  %v1603 = vpop.f32.mrb[0].mxu0
  %1604 = vmatprep.mubr.bf16.mxu0 %v1420
  %1605 = vmatmul.mubr.bf16.gmra.mrb[0].mxu0 %v1419
  %v1606 = vpop.f32.mrb[0].mxu0
  %v1607 = vadd.f32 %v1458, %v1606
  %v1608 = vpop.f32.mrb[0].mxu0
  %v1609 = vpop.f32.mrb[0].mxu0
  %v1610 = vadd.f32 %v1458, %v1609
  %v1611 = vpop.f32.mrb[0].mxu0
  %1612 = vdwg.mxu0
  %v1613 = vmax.f32 %v1591, 0.0
  %v1614 = vmax.f32 %v1594, 0.0
  %v1615 = vmax.f32 %v1599, 0.0
  %v1616 = vmax.f32 %v1602, 0.0
  %v1617 = vmax.f32 %v1607, 0.0
  %v1618 = vmax.f32 %v1610, 0.0
  %v1619 = vpack.c.bf16 %v1614, %v1613
  %v1620 = vpack.c.bf16 %v1616, %v1615
  %v1621 = vpack.c.bf16 %v1618, %v1617
  %v1622 = vld [vmem:[%s11] sm:$0xf]
  %v1623 = vld [vmem:[%s11 + $0x4] sm:$0xf]
  %v1624 = vld [vmem:[%s11 + $0x8] sm:$0xf]
  %v1625 = vld [vmem:[%s11 + $0xc] sm:$0xf]
  %v1626 = vld [vmem:[%s11 + $0x10] sm:$0xf]
  %v1627 = vld [vmem:[%s11 + $0x14] sm:$0xf]
  %v1628 = vld [vmem:[%s11 + $0x18] sm:$0xf]
  %v1629 = vld [vmem:[%s11 + $0x1c] sm:$0xf]
  %v1630 = vld [vmem:[%s11 + $0x20] sm:$0xf]
  %v1631 = vld [vmem:[%s11 + $0x24] sm:$0xf]
  %v1632 = vld [vmem:[%s11 + $0x28] sm:$0xf]
  %v1633 = vld [vmem:[%s11 + $0x2c] sm:$0xf]
  %v1634 = vld [vmem:[%s11 + $0x30] sm:$0xf]
  %v1635 = vld [vmem:[%s11 + $0x34] sm:$0xf]
  %v1636 = vld [vmem:[%s11 + $0x38] sm:$0xf]
  %v1637 = vld [vmem:[%s12] sm:$0x1]
  %v1639 = vlaneseq
  %v1640 = vshrl.u32 %v1639, 7
  %v1641 = vsub.s32 0, %v1640
  %v1642 = vrot.slane %v1637, %v1641
  %v1659 = vunpack.c.l.b16 %v1622
  %v1660 = vunpack.c.l.b16 %v1623
  %v1661 = vunpack.c.l.b16 %v1624
  %v1662 = vunpack.c.l.b16 %v1625
  %v1663 = vunpack.c.l.b16 %v1626
  %v1664 = vunpack.c.l.b16 %v1627
  %v1665 = vunpack.c.l.b16 %v1628
  %v1666 = vunpack.c.l.b16 %v1629
  %v1667 = vunpack.c.l.b16 %v1630
  %v1668 = vunpack.c.l.b16 %v1631
  %v1669 = vunpack.c.l.b16 %v1632
  %v1670 = vunpack.c.l.b16 %v1633
  %v1671 = vunpack.c.l.b16 %v1634
  %v1672 = vunpack.c.l.b16 %v1635
  %v1673 = vunpack.c.l.b16 %v1636
  %v1674 = vpack.c.b16 %v1660, %v1659
  %v1675 = vpack.c.b16 %v1662, %v1661
  %v1676 = vpack.c.b16 %v1664, %v1663
  %v1677 = vpack.c.b16 %v1666, %v1665
  %v1678 = vpack.c.b16 %v1668, %v1667
  %v1679 = vpack.c.b16 %v1670, %v1669
  %v1680 = vpack.c.b16 %v1672, %v1671
  %v1681 = vpack.c.b16 %v1673, %v1673
  %vm1689 = vcmask 982016
  %v1691 = vsel %vm1689, %v1619, 0
  %v1694 = vsel %vm1689, %v1620, 0
  %v1697 = vsel %vm1689, %v1621, 0
  %v1700 = vsel %vm626, %v1681, 0
  %1702 = vmatprep.subr.bf16.mxu0 0
  %1703 = vmatpush1.bf16.msra.mxu0 %v1674
  %1704 = vmatprep.subr.bf16.mxu0 0
  %1705 = vmatpush1.bf16.msra.mxu0 %v1675
  %1706 = vmatprep.subr.bf16.mxu0 0
  %1707 = vmatpush1.bf16.msra.mxu0 %v1676
  %1708 = vmatprep.subr.bf16.mxu0 0
  %1709 = vmatpush1.bf16.msra.mxu0 %v1677
  %1710 = vmatprep.subr.bf16.mxu0 0
  %1711 = vmatpush1.bf16.msra.mxu0 %v1678
  %1712 = vmatprep.subr.bf16.mxu0 0
  %1713 = vmatpush1.bf16.msra.mxu0 %v1679
  %1714 = vmatprep.subr.bf16.mxu0 0
  %1715 = vmatpush1.bf16.msra.mxu0 %v1680
  %1716 = vmatprep.subr.bf16.mxu0 0
  %1717 = vmatpush1.bf16.msra.mxu0 %v1700
  %1718 = vmatprep.subr.bf16.mxu0 0
  %1719 = vmatpush1.bf16.msra.mxu0 0
  %1720 = vmatprep.subr.bf16.mxu0 0
  %1721 = vmatpush1.bf16.msra.mxu0 0
  %1722 = vmatprep.subr.bf16.mxu0 0
  %1723 = vmatpush1.bf16.msra.mxu0 0
  %1724 = vmatprep.subr.bf16.mxu0 0
  %1725 = vmatpush1.bf16.msra.mxu0 0
  %1726 = vmatprep.subr.bf16.mxu0 0
  %1727 = vmatpush1.bf16.msra.mxu0 0
  %1728 = vmatprep.subr.bf16.mxu0 0
  %1729 = vmatpush1.bf16.msra.mxu0 0
  %1730 = vmatprep.subr.bf16.mxu0 0
  %1731 = vmatpush1.bf16.msra.mxu0 0
  %1732 = vmatprep.subr.bf16.mxu0 0
  %1733 = vmatpush1.bf16.msra.mxu0 0
  %1734 = vmatprep.mubr.bf16.mxu0 0
  %1735 = vmatmul.mubr.bf16.gmra.mrb[0].mxu0 %v1691
  %v1736 = vpop.f32.mrb[0].mxu0
  %v1737 = vadd.f32 %v1642, %v1736
  %v1738 = vpop.f32.mrb[0].mxu0
  %v1739 = vpop.f32.mrb[0].mxu0
  %v1740 = vadd.f32 %v1642, %v1739
  %v1741 = vpop.f32.mrb[0].mxu0
  %1742 = vmatprep.mubr.bf16.mxu0 0
  %1743 = vmatmul.mubr.bf16.gmra.mrb[0].mxu0 %v1694
  %v1744 = vpop.f32.mrb[0].mxu0
  %v1745 = vadd.f32 %v1642, %v1744
  %v1746 = vpop.f32.mrb[0].mxu0
  %v1747 = vpop.f32.mrb[0].mxu0
  %v1748 = vadd.f32 %v1642, %v1747
  %v1749 = vpop.f32.mrb[0].mxu0
  %1750 = vmatprep.mubr.bf16.mxu0 0
  %1751 = vmatmul.mubr.bf16.gmra.mrb[0].mxu0 %v1697
  %v1752 = vpop.f32.mrb[0].mxu0
  %v1753 = vadd.f32 %v1642, %v1752
  %v1754 = vpop.f32.mrb[0].mxu0
  %v1755 = vpop.f32.mrb[0].mxu0
  %v1756 = vadd.f32 %v1642, %v1755
  %v1757 = vpop.f32.mrb[0].mxu0
  %1758 = vdwg.mxu0
  %v1759 = vmax.f32 %v1737, 0.0
  %v1760 = vmax.f32 %v1740, 0.0
  %v1761 = vmax.f32 %v1745, 0.0
  %v1762 = vmax.f32 %v1748, 0.0
  %v1763 = vmax.f32 %v1753, 0.0
  %v1764 = vmax.f32 %v1756, 0.0
  %v1765 = vpack.c.bf16 %v1760, %v1759
  %v1766 = vpack.c.bf16 %v1762, %v1761
  %v1767 = vpack.c.bf16 %v1764, %v1763
  %v1768 = vld [vmem:[%s13] sm:$0xf]
  %v1769 = vld [vmem:[%s13 + $0x4] sm:$0xf]
  %v1770 = vld [vmem:[%s13 + $0x8] sm:$0xf]
  %v1771 = vld [vmem:[%s13 + $0xc] sm:$0xf]
  %v1772 = vld [vmem:[%s13 + $0x10] sm:$0xf]
  %v1773 = vld [vmem:[%s13 + $0x14] sm:$0xf]
  %v1774 = vld [vmem:[%s13 + $0x18] sm:$0xf]
  %v1775 = vld [vmem:[%s13 + $0x1c] sm:$0xf]
  %v1776 = vld [vmem:[%s13 + $0x20] sm:$0xf]
  %v1777 = vld [vmem:[%s13 + $0x24] sm:$0xf]
  %v1778 = vld [vmem:[%s13 + $0x28] sm:$0x3]
  %v1779 = vld [vmem:[%s14] sm:$0x1]
  %v1781 = vlaneseq
  %v1782 = vshrl.u32 %v1781, 7
  %v1783 = vsub.s32 0, %v1782
  %v1784 = vrot.slane %v1779, %v1783
  %v1797 = vunpack.c.l.b16 %v1768
  %v1798 = vunpack.c.l.b16 %v1769
  %v1799 = vunpack.c.l.b16 %v1770
  %v1800 = vunpack.c.l.b16 %v1771
  %v1801 = vunpack.c.l.b16 %v1772
  %v1802 = vunpack.c.l.b16 %v1773
  %v1803 = vunpack.c.l.b16 %v1774
  %v1804 = vunpack.c.l.b16 %v1775
  %v1805 = vunpack.c.l.b16 %v1776
  %v1806 = vunpack.c.l.b16 %v1777
  %v1807 = vunpack.c.l.b16 %v1778
  %v1808 = vpack.c.b16 %v1798, %v1797
  %v1809 = vpack.c.b16 %v1800, %v1799
  %v1810 = vpack.c.b16 %v1802, %v1801
  %v1811 = vpack.c.b16 %v1804, %v1803
  %v1812 = vpack.c.b16 %v1806, %v1805
  %v1813 = vpack.c.b16 %v1807, %v1807
  %vm1819 = vcmask 687104
  %v1821 = vsel %vm1819, %v1765, 0
  %v1824 = vsel %vm1819, %v1766, 0
  %v1827 = vsel %vm1819, %v1767, 0
  %v1830 = vsel %vm641, %v1813, 0
  %1832 = vmatprep.subr.bf16.mxu0 0
  %1833 = vmatpush1.bf16.msra.mxu0 %v1808
  %1834 = vmatprep.subr.bf16.mxu0 0
  %1835 = vmatpush1.bf16.msra.mxu0 %v1809
  %1836 = vmatprep.subr.bf16.mxu0 0
  %1837 = vmatpush1.bf16.msra.mxu0 %v1810
  %1838 = vmatprep.subr.bf16.mxu0 0
  %1839 = vmatpush1.bf16.msra.mxu0 %v1811
  %1840 = vmatprep.subr.bf16.mxu0 0
  %1841 = vmatpush1.bf16.msra.mxu0 %v1812
  %1842 = vmatprep.subr.bf16.mxu0 0
  %1843 = vmatpush1.bf16.msra.mxu0 %v1830
  %1844 = vmatprep.subr.bf16.mxu0 0
  %1845 = vmatpush1.bf16.msra.mxu0 0
  %1846 = vmatprep.subr.bf16.mxu0 0
  %1847 = vmatpush1.bf16.msra.mxu0 0
  %1848 = vmatprep.subr.bf16.mxu0 0
  %1849 = vmatpush1.bf16.msra.mxu0 0
  %1850 = vmatprep.subr.bf16.mxu0 0
  %1851 = vmatpush1.bf16.msra.mxu0 0
  %1852 = vmatprep.subr.bf16.mxu0 0
  %1853 = vmatpush1.bf16.msra.mxu0 0
  %1854 = vmatprep.subr.bf16.mxu0 0
  %1855 = vmatpush1.bf16.msra.mxu0 0
  %1856 = vmatprep.subr.bf16.mxu0 0
  %1857 = vmatpush1.bf16.msra.mxu0 0
  %1858 = vmatprep.subr.bf16.mxu0 0
  %1859 = vmatpush1.bf16.msra.mxu0 0
  %1860 = vmatprep.subr.bf16.mxu0 0
  %1861 = vmatpush1.bf16.msra.mxu0 0
  %1862 = vmatprep.subr.bf16.mxu0 0
  %1863 = vmatpush1.bf16.msra.mxu0 0
  %1864 = vmatprep.mubr.bf16.mxu0 0
  %1865 = vmatmul.mubr.bf16.gmra.mrb[0].mxu0 %v1821
  %v1866 = vpop.f32.mrb[0].mxu0
  %v1867 = vadd.f32 %v1784, %v1866
  %v1868 = vpop.f32.mrb[0].mxu0
  %v1869 = vpop.f32.mrb[0].mxu0
  %v1870 = vadd.f32 %v1784, %v1869
  %v1871 = vpop.f32.mrb[0].mxu0
  %1872 = vmatprep.mubr.bf16.mxu0 0
  %1873 = vmatmul.mubr.bf16.gmra.mrb[0].mxu0 %v1824
  %v1874 = vpop.f32.mrb[0].mxu0
  %v1875 = vadd.f32 %v1784, %v1874
  %v1876 = vpop.f32.mrb[0].mxu0
  %v1877 = vpop.f32.mrb[0].mxu0
  %v1878 = vadd.f32 %v1784, %v1877
  %v1879 = vpop.f32.mrb[0].mxu0
  %1880 = vmatprep.mubr.bf16.mxu0 0
  %1881 = vmatmul.mubr.bf16.gmra.mrb[0].mxu0 %v1827
  %v1882 = vpop.f32.mrb[0].mxu0
  %v1883 = vadd.f32 %v1784, %v1882
  %v1884 = vpop.f32.mrb[0].mxu0
  %v1885 = vpop.f32.mrb[0].mxu0
  %v1886 = vadd.f32 %v1784, %v1885
  %v1887 = vpop.f32.mrb[0].mxu0
  %1888 = vdwg.mxu0
  %1889 = vmax.xlane.f32.xlu0 %v1867
  %v1890 = vpop.xlane.xlu0 %1889
  %1891 = vmax.xlane.f32.xlu0 %v1870
  %v1892 = vpop.xlane.xlu0 %1891
  %1893 = vmax.xlane.f32.xlu0 %v1875
  %v1894 = vpop.xlane.xlu0 %1893
  %1895 = vmax.xlane.f32.xlu0 %v1878
  %v1896 = vpop.xlane.xlu0 %1895
  %1897 = vmax.xlane.f32.xlu0 %v1883
  %v1898 = vpop.xlane.xlu0 %1897
  %1899 = vmax.xlane.f32.xlu0 %v1886
  %v1900 = vpop.xlane.xlu0 %1899
  %v1901 = vsub.f32 %v1867, %v1890
  %v1902 = vsub.f32 %v1870, %v1892
  %v1903 = vsub.f32 %v1875, %v1894
  %v1904 = vsub.f32 %v1878, %v1896
  %v1905 = vsub.f32 %v1883, %v1898
  %v1906 = vsub.f32 %v1886, %v1900
  %v1907 = vmul.f32 %v1901, 1.442695
  %v1908 = vpow.pop %v1907
  %v1909 = vmul.f32 %v1902, 1.442695
  %v1910 = vpow.pop %v1909
  %v1911 = vmul.f32 %v1903, 1.442695
  %v1912 = vpow.pop %v1911
  %v1913 = vmul.f32 %v1904, 1.442695
  %v1914 = vpow.pop %v1913
  %v1915 = vmul.f32 %v1905, 1.442695
  %v1916 = vpow.pop %v1915
  %v1917 = vmul.f32 %v1906, 1.442695
  %v1918 = vpow.pop %v1917
  %1919 = vadd.xlane.f32.xlu0 %v1908
  %v1920 = vpop.xlane.xlu0 %1919
  %1921 = vadd.xlane.f32.xlu0 %v1910
  %v1922 = vpop.xlane.xlu0 %1921
  %1923 = vadd.xlane.f32.xlu0 %v1912
  %v1924 = vpop.xlane.xlu0 %1923
  %1925 = vadd.xlane.f32.xlu0 %v1914
  %v1926 = vpop.xlane.xlu0 %1925
  %1927 = vadd.xlane.f32.xlu0 %v1916
  %v1928 = vpop.xlane.xlu0 %1927
  %1929 = vadd.xlane.f32.xlu0 %v1918
  %v1930 = vpop.xlane.xlu0 %1929
  %v1931 = vlog2.pop %v1920
  %v1932 = vmul.f32 %v1931, 0.6931472
  %v1933 = vlog2.pop %v1922
  %v1934 = vmul.f32 %v1933, 0.6931472
  %v1935 = vlog2.pop %v1924
  %v1936 = vmul.f32 %v1935, 0.6931472
  %v1937 = vlog2.pop %v1926
  %v1938 = vmul.f32 %v1937, 0.6931472
  %v1939 = vlog2.pop %v1928
  %v1940 = vmul.f32 %v1939, 0.6931472
  %v1941 = vlog2.pop %v1930
  %v1942 = vmul.f32 %v1941, 0.6931472
  %v1943 = vsub.f32 %v1901, %v1932
  %v1944 = vsub.f32 %v1902, %v1934
  %v1945 = vsub.f32 %v1903, %v1936
  %v1946 = vsub.f32 %v1904, %v1938
  %v1947 = vsub.f32 %v1905, %v1940
  %v1948 = vsub.f32 %v1906, %v1942
  %1949 = vst [vmem:[%s15] sm:$0xff] %v1943
  %1950 = vst [vmem:[%s15 + $0x8] sm:$0xff] %v1944
  %1951 = vst [vmem:[%s15 + $0x10] sm:$0xff] %v1945
  %1952 = vst [vmem:[%s15 + $0x18] sm:$0xff] %v1946
  %1953 = vst [vmem:[%s15 + $0x20] sm:$0xff] %v1947
  %1954 = vst [vmem:[%s15 + $0x28] sm:$0xff] %v1948
  // Predicated region
  $region62: #{lenet_forward.1} parent=0 // pred_check
    _
  $region63: #{lenet_forward.1} parent=0 // pred_check_branch
    %1956 = sbr.rel (0) target = $region65
  $region64: #{lenet_forward.1} parent=0 // pred_region
    _
  $region65: #{lenet_forward.1} parent=0 // pred_fallthru
    _
  // Predicated region
  $region66: #{lenet_forward.1} parent=0 // pred_check
    _
  $region67: #{lenet_forward.1} parent=0 // pred_check_branch
    %1958 = sbr.rel (0) target = $region69
  $region68: #{lenet_forward.1} parent=0 // pred_region
    _
  $region69: #{lenet_forward.1} parent=0 // pred_fallthru
    _

</llo_original>
